<compile_context>
chip_gen: v7x
topology: tpu7x:2x2x1
jax: 0.10.0
libtpu: 0.0.40
codegen_flags: <defaults>
</compile_context>

<pallas_src>
import jax
import jax.numpy as jnp
from jax.experimental import pallas as pl
from jax.experimental.pallas import tpu as pltpu


_LANE = 128
_SUBLANE = 8
_NEG_INF = -1e9


def _round_up(x, m):
    return ((x + m - 1) // m) * m


def _pad2d(x, rows, cols, fill=0.0):
    return jnp.pad(
        x, ((0, rows - x.shape[0]), (0, cols - x.shape[1])), constant_values=fill
    )


def _pad_gates(w, rows, cols):
    """(R, 3G) with gates [r|z|n] -> (rows, 3*cols); each gate block zero-padded
    so in-kernel gate slices land on 128-lane boundaries."""
    g = w.shape[1] // 3
    return jnp.concatenate(
        [_pad2d(w[:, k * g:(k + 1) * g], rows, cols) for k in range(3)], axis=1
    )


# -----------------------------------------------------------------------------
# Kernel: attention softmax, bmm, combine+relu, GRU cell fused (grid step 0),
# output projection + online log_softmax tiled over the vocab grid axis.
# -----------------------------------------------------------------------------
def attn_decoder_kernel(
    eh_ref,       # (Bp, 2Hp) f32   [embedded | hidden], VMEM-resident
    enc_ref,      # (Lp, Hp)  bf16  encoder_outputs, resident
    w_e_ref,      # (Hp, Lp+Hp)  bf16  [w_attn_e | w_comb_e], resident
    w_h_ref,      # (Hp, Lp+3Hp) bf16  [w_attn_h | w_hh(r|z|n)], resident
    w_ca_ref,     # (Hp, Hp)  bf16  attn_combine (attn_applied half), resident
    w_ih_ref,     # (Hp, 3Hp) bf16  GRU input weights [r|z|n], resident
    bias_ref,     # (1, Lp+7Hp) f32 [b_attn(-inf pad) | b_comb | b_ih | b_hh], resident
    w_out_ref,    # (Hp, tn)  bf16  vocab-projection tile (streamed per grid step)
    b_out_ref,    # (1, tn)   f32   vocab bias tile, -inf padded (streamed)
    out_ref,      # (Bp, Op+Hp+Lp) f32 packed [logp | h_new | attn_w], resident
    h_scr,        # (Bp, Hp) f32   new hidden (persists across vocab tiles)
    o_scr,        # (n_tiles, Bp, tn) f32  raw logits staging
    m_scr,        # (Bp, 1) f32    running max
    l_scr,        # (Bp, 1) f32    running sum(exp)
):
    f32 = jnp.float32
    bf16 = jnp.bfloat16
    Hp = w_ca_ref.shape[1]
    Lp = enc_ref.shape[0]
    tn = w_out_ref.shape[1]
    n_tiles = o_scr.shape[0]
    Op = n_tiles * tn
    j = pl.program_id(0)

    off_comb = Lp
    off_ih = Lp + Hp
    off_hh = Lp + 4 * Hp

    # ---- attention + combine + GRU: only on the first vocab tile -------------
    @pl.when(j == 0)
    def _attend_and_gru():
        emb = eh_ref[:, 0:Hp]
        hid = eh_ref[:, Hp:2 * Hp]
        emb_bf = emb.astype(bf16)
        hid_bf = hid.astype(bf16)

        # fused RHS matmuls (cat-matmuls expressed lane-dense)
        e_proj = jnp.dot(emb_bf, w_e_ref[...], preferred_element_type=f32)
        h_proj = jnp.dot(hid_bf, w_h_ref[...], preferred_element_type=f32)

        # attn_weights = softmax(Linear(cat(embedded, hidden)))
        logits = e_proj[:, 0:Lp] + h_proj[:, 0:Lp] + bias_ref[:, 0:Lp]
        mx = jnp.max(logits, axis=1, keepdims=True)
        ex = jnp.exp(logits - mx)
        attn_w = ex / jnp.sum(ex, axis=1, keepdims=True)   # exact: attn_w is an output

        # attn_applied = bmm(attn_weights, encoder_outputs)
        attn_applied = jnp.dot(attn_w.astype(bf16), enc_ref[...],
                               preferred_element_type=f32)

        # output = relu(attn_combine(cat(embedded, attn_applied)))
        combined = (
            e_proj[:, Lp:Lp + Hp]
            + jnp.dot(attn_applied.astype(bf16), w_ca_ref[...],
                      preferred_element_type=f32)
            + bias_ref[:, off_comb:off_comb + Hp]
        )
        x_bf = jnp.maximum(combined, 0.0).astype(bf16)

        # GRU cell (PyTorch gate order r, z, n); gates fused on the lane axis.
        i_g = (jnp.dot(x_bf, w_ih_ref[...], preferred_element_type=f32)
               + bias_ref[:, off_ih:off_ih + 3 * Hp])
        h_g = h_proj[:, Lp:Lp + 3 * Hp] + bias_ref[:, off_hh:off_hh + 3 * Hp]

        r = jax.nn.sigmoid(i_g[:, 0:Hp] + h_g[:, 0:Hp])
        z = jax.nn.sigmoid(i_g[:, Hp:2 * Hp] + h_g[:, Hp:2 * Hp])
        n = jnp.tanh(i_g[:, 2 * Hp:3 * Hp] + r * h_g[:, 2 * Hp:3 * Hp])
        h_new = (1.0 - z) * n + z * hid

        h_scr[...] = h_new
        m_scr[...] = jnp.full(m_scr.shape, -jnp.inf, f32)
        l_scr[...] = jnp.zeros(l_scr.shape, f32)

        out_ref[:, Op:Op + Hp] = h_new
        out_ref[:, Op + Hp:Op + Hp + Lp] = attn_w

    # ---- vocab projection tile j + online logsumexp ---------------------------
    o_tile = (jnp.dot(h_scr[...].astype(bf16), w_out_ref[...],
                      preferred_element_type=f32)
              + b_out_ref[...])
    o_scr[j] = o_tile

    m_prev = m_scr[...]
    m_new = jnp.maximum(m_prev, jnp.max(o_tile, axis=1, keepdims=True))
    l_scr[...] = (l_scr[...] * jnp.exp(m_prev - m_new)
                  + jnp.sum(jnp.exp(o_tile - m_new), axis=1, keepdims=True))
    m_scr[...] = m_new

    # ---- finalize log-probs on the last tile ----------------------------------
    @pl.when(j == pl.num_programs(0) - 1)
    def _finalize_logp():
        lse = m_scr[...] + jnp.log(l_scr[...])
        for t in range(n_tiles):  # static unroll; 128-aligned unmasked stores
            out_ref[:, t * tn:(t + 1) * tn] = o_scr[t] - lse


# -----------------------------------------------------------------------------
# One-time parameter preparation (hoisted out of the per-step forward).
# -----------------------------------------------------------------------------
def prepare_params(params):
    """Pad to lane-dense shapes, fuse matmul RHS groups, pack biases, cast bf16.

    Expects weights in (in_features, out_features) layout, GRU weights (H, 3H)
    with gate order [r|z|n].  (PyTorch nn.GRUCell stores (3H, H): transpose
    when importing trained weights.)
    """
    H = params["w_ih"].shape[0]
    L = params["w_attn_e"].shape[1]
    O = params["w_out"].shape[1]
    Hp, Lp, Op = _round_up(H, _LANE), _round_up(L, _LANE), _round_up(O, _LANE)
    f32, bf16 = jnp.float32, jnp.bfloat16

    w_e_fused = jnp.concatenate(
        [_pad2d(params["w_attn_e"], Hp, Lp), _pad2d(params["w_comb_e"], Hp, Hp)],
        axis=1).astype(bf16)                                    # (Hp, Lp+Hp)
    w_h_fused = jnp.concatenate(
        [_pad2d(params["w_attn_h"], Hp, Lp), _pad_gates(params["w_hh"], Hp, Hp)],
        axis=1).astype(bf16)                                    # (Hp, Lp+3Hp)
    w_comb_a = _pad2d(params["w_comb_a"], Hp, Hp).astype(bf16)  # (Hp, Hp)
    w_ih = _pad_gates(params["w_ih"], Hp, Hp).astype(bf16)      # (Hp, 3Hp)
    w_out = _pad2d(params["w_out"], Hp, Op).astype(bf16)        # (Hp, Op)

    # bias slab [b_attn(-inf pad) | b_comb | b_ih | b_hh]; b_out kept separate so
    # it can be streamed per vocab tile alongside w_out.
    bias = jnp.concatenate(
        [_pad2d(params["b_attn"], 1, Lp, fill=_NEG_INF),
         _pad2d(params["b_comb"], 1, Hp),
         _pad_gates(params["b_ih"], 1, Hp),
         _pad_gates(params["b_hh"], 1, Hp)], axis=1).astype(f32)  # (1, Lp+7Hp)
    b_out = _pad2d(params["b_out"], 1, Op, fill=_NEG_INF).astype(f32)  # (1, Op)

    return {"w_e_fused": w_e_fused, "w_h_fused": w_h_fused, "w_comb_a": w_comb_a,
            "w_ih": w_ih, "w_out": w_out, "bias": bias, "b_out": b_out,
            "dims": (H, L, O, Hp, Lp, Op)}


# -----------------------------------------------------------------------------
# Per-step forward: pads activations only, then one pallas_call.
# -----------------------------------------------------------------------------
def attn_decoder_forward(embedded, hidden, encoder_outputs, prep):
    """embedded: (1, B, H), hidden: (1, B, H), encoder_outputs: (L, H)."""
    emb, hid = embedded[0], hidden[0]
    B = emb.shape[0]
    H, L, O, Hp, Lp, Op = prep["dims"]
    Bp = _round_up(B, _SUBLANE)
    f32, bf16 = jnp.float32, jnp.bfloat16

    # vocab tile width: widest 128-multiple divisor of Op, capped at 1024
    tn = next(t for t in (1024, 512, 256, 128) if Op % t == 0)
    n_tiles = Op // tn

    eh = jnp.concatenate([_pad2d(emb.astype(f32), Bp, Hp),
                          _pad2d(hid.astype(f32), Bp, Hp)], axis=1)  # (Bp, 2Hp)
    enc = _pad2d(encoder_outputs, Lp, Hp).astype(bf16)               # (Lp, Hp)

    # Intentional VMEM budget: resident weights/activations (x2 buffering slack)
    # + double-buffered streamed vocab tiles + packed output + scratch + headroom.
    resident = (eh.size * 4 + enc.size * 2
                + (prep["w_e_fused"].size + prep["w_h_fused"].size
                   + prep["w_comb_a"].size + prep["w_ih"].size) * 2
                + prep["bias"].size * 4)
    streamed = 2 * (Hp * tn * 2 + tn * 4)
    out_bytes = Bp * (Op + Hp + Lp) * 4
    scratch_bytes = (Bp * Hp + n_tiles * Bp * tn + 2 * Bp) * 4
    vmem_limit = int(min(max(2 * (resident + out_bytes) + streamed + scratch_bytes
                             + (2 << 20), 8 << 20), 100 << 20))

    def res(shape):  # VMEM-resident across the vocab grid axis
        return pl.BlockSpec(shape, lambda j: (0, 0))

    grid_spec = pltpu.PrefetchScalarGridSpec(
        num_scalar_prefetch=0,
        grid=(n_tiles,),
        in_specs=[
            res((Bp, 2 * Hp)),                        # eh
            res((Lp, Hp)),                            # encoder_outputs
            res((Hp, Lp + Hp)),                       # w_e_fused
            res((Hp, Lp + 3 * Hp)),                   # w_h_fused
            res((Hp, Hp)),                            # w_comb_a
            res((Hp, 3 * Hp)),                        # w_ih
            res((1, Lp + 7 * Hp)),                    # bias slab
            pl.BlockSpec((Hp, tn), lambda j: (0, j)),  # w_out tile (streamed)
            pl.BlockSpec((1, tn), lambda j: (0, j)),   # b_out tile (streamed)
        ],
        out_specs=pl.BlockSpec((Bp, Op + Hp + Lp), lambda j: (0, 0)),
        scratch_shapes=[
            pltpu.VMEM((Bp, Hp), f32),                # h_new
            pltpu.VMEM((n_tiles, Bp, tn), f32),       # raw logits staging
            pltpu.VMEM((Bp, 1), f32),                 # running max
            pltpu.VMEM((Bp, 1), f32),                 # running sum(exp)
        ],
    )

    packed = pl.pallas_call(
        attn_decoder_kernel,
        out_shape=jax.ShapeDtypeStruct((Bp, Op + Hp + Lp), f32),
        grid_spec=grid_spec,
        compiler_params=pltpu.CompilerParams(
            dimension_semantics=("arbitrary",),       # sequential: lse carry + step-0 GRU
            vmem_limit_bytes=vmem_limit),
    )(eh, enc, prep["w_e_fused"], prep["w_h_fused"], prep["w_comb_a"],
      prep["w_ih"], prep["bias"], prep["w_out"], prep["b_out"])

    logp = packed[:B, :O]
    h_new = packed[:B, Op:Op + H]
    attn_w = packed[:B, Op + Hp:Op + Hp + L]
    # restore PyTorch shape convention for hidden: (1, B, H)
    return logp, h_new[None], attn_w


# -----------------------------------------------------------------------------
# Pure-JAX f32 reference (for correctness checking only; unfused params)
# -----------------------------------------------------------------------------
def attn_decoder_reference(embedded, hidden, encoder_outputs, p):
    emb, hid = embedded[0], hidden[0]
    H = hid.shape[1]
    logits = emb @ p["w_attn_e"] + hid @ p["w_attn_h"] + p["b_attn"]
    attn_w = jax.nn.softmax(logits, axis=1)
    attn_applied = attn_w @ encoder_outputs
    x = jax.nn.relu(emb @ p["w_comb_e"] + attn_applied @ p["w_comb_a"] + p["b_comb"])
    i_g = x @ p["w_ih"] + p["b_ih"]
    h_g = hid @ p["w_hh"] + p["b_hh"]
    r = jax.nn.sigmoid(i_g[:, :H] + h_g[:, :H])
    z = jax.nn.sigmoid(i_g[:, H:2 * H] + h_g[:, H:2 * H])
    n = jnp.tanh(i_g[:, 2 * H:] + r * h_g[:, 2 * H:])
    h_new = (1.0 - z) * n + z * hid
    o = h_new @ p["w_out"] + p["b_out"]
    return jax.nn.log_softmax(o, axis=1), h_new[None], attn_w


# -----------------------------------------------------------------------------
# Deterministic parameter init + demo
# -----------------------------------------------------------------------------
def init_params(key, hidden_size, max_length, output_size):
    H, L, O = hidden_size, max_length, output_size
    ks = jax.random.split(key, 12)
    s = 0.1
    return {
        "w_attn_e": s * jax.random.normal(ks[0], (H, L), jnp.float32),
        "w_attn_h": s * jax.random.normal(ks[1], (H, L), jnp.float32),
        "b_attn":   s * jax.random.normal(ks[2], (1, L), jnp.float32),
        "w_comb_e": s * jax.random.normal(ks[3], (H, H), jnp.float32),
        "w_comb_a": s * jax.random.normal(ks[4], (H, H), jnp.float32),
        "b_comb":   s * jax.random.normal(ks[5], (1, H), jnp.float32),
        # GRU weights in (H, 3H) layout, gate order [r | z | n]
        "w_ih":     s * jax.random.normal(ks[6], (H, 3 * H), jnp.float32),
        "b_ih":     s * jax.random.normal(ks[7], (1, 3 * H), jnp.float32),
        "w_hh":     s * jax.random.normal(ks[8], (H, 3 * H), jnp.float32),
        "b_hh":     s * jax.random.normal(ks[9], (1, 3 * H), jnp.float32),
        "w_out":    s * jax.random.normal(ks[10], (H, O), jnp.float32),
        "b_out":    s * jax.random.normal(ks[11], (1, O), jnp.float32),
    }


if __name__ == "__main__":
    B, H, L, O = 2, 32, 8, 16   # batch, hidden_size, max_length, output_size

    key = jax.random.PRNGKey(0)
    k_emb, k_hid, k_enc, k_par = jax.random.split(key, 4)

    embedded = jax.random.normal(k_emb, (1, B, H), jnp.float32)
    hidden = jax.random.normal(k_hid, (1, B, H), jnp.float32)
    encoder_outputs = jax.random.normal(k_enc, (L, H), jnp.float32)
    params = init_params(k_par, H, L, O)

    # one-time weight prep (padding / fusing / bf16 cast hoisted out of the step)
    prep = prepare_params(params)
    jax.block_until_ready(prep)

    logp, h_new, attn_w = attn_decoder_forward(embedded, hidden, encoder_outputs, prep)
    jax.block_until_ready((logp, h_new, attn_w))

    r_logp, r_h, r_attn = attn_decoder_reference(embedded, hidden, encoder_outputs, params)
    # bf16 matmul operands (f32 accumulation) -> tolerances loosened accordingly.
    assert jnp.allclose(logp, r_logp, atol=2e-2, rtol=2e-2), "logp mismatch"
    assert jnp.allclose(h_new, r_h, atol=2e-2, rtol=2e-2), "hidden mismatch"
    assert jnp.allclose(attn_w, r_attn, atol=2e-2, rtol=2e-2), "attn_w mismatch"

    print("KERNEL_OK")
</pallas_src>

<mosaic_0001>
module attributes {stable_mosaic.version = 11 : i64} {
  func.func @attn_decoder_kernel(%arg0: i32, %arg1: memref<8x256xf32, #tpu.memory_space<vmem>>, %arg2: memref<128x128xbf16, #tpu.memory_space<vmem>>, %arg3: memref<128x256xbf16, #tpu.memory_space<vmem>>, %arg4: memref<128x512xbf16, #tpu.memory_space<vmem>>, %arg5: memref<128x128xbf16, #tpu.memory_space<vmem>>, %arg6: memref<128x384xbf16, #tpu.memory_space<vmem>>, %arg7: memref<1x1024xf32, #tpu.memory_space<vmem>>, %arg8: memref<128x128xbf16, #tpu.memory_space<vmem>>, %arg9: memref<1x128xf32, #tpu.memory_space<vmem>>, %arg10: memref<8x384xf32, #tpu.memory_space<vmem>>, %arg11: memref<8x128xf32, #tpu.memory_space<vmem>>, %arg12: memref<1x8x128xf32, #tpu.memory_space<vmem>>, %arg13: memref<8x1xf32, #tpu.memory_space<vmem>>, %arg14: memref<8x1xf32, #tpu.memory_space<vmem>>) attributes {dimension_semantics = [#tpu.dimension_semantics<arbitrary>], iteration_bounds = array<i64: 1>, scalar_prefetch = 0 : i64, scratch_operands = 4 : i64, tpu.core_type = #tpu.core_type<tc>, window_params = [{pipeline_mode = #tpu.pipeline_mode<synchronous>, transform_indices = @transform_0, window_bounds = array<i64: 8, 256>}, {pipeline_mode = #tpu.pipeline_mode<synchronous>, transform_indices = @transform_1, window_bounds = array<i64: 128, 128>}, {pipeline_mode = #tpu.pipeline_mode<synchronous>, transform_indices = @transform_2, window_bounds = array<i64: 128, 256>}, {pipeline_mode = #tpu.pipeline_mode<synchronous>, transform_indices = @transform_3, window_bounds = array<i64: 128, 512>}, {pipeline_mode = #tpu.pipeline_mode<synchronous>, transform_indices = @transform_4, window_bounds = array<i64: 128, 128>}, {pipeline_mode = #tpu.pipeline_mode<synchronous>, transform_indices = @transform_5, window_bounds = array<i64: 128, 384>}, {pipeline_mode = #tpu.pipeline_mode<synchronous>, transform_indices = @transform_6, window_bounds = array<i64: 1, 1024>}, {transform_indices = @transform_7, window_bounds = array<i64: 128, 128>}, {transform_indices = @transform_8, window_bounds = array<i64: 1, 128>}, {pipeline_mode = #tpu.pipeline_mode<synchronous>, transform_indices = @transform_9, window_bounds = array<i64: 8, 384>}]} {
    %c0_i32 = arith.constant 0 : i32
    %0 = arith.cmpi eq, %arg0, %c0_i32 : i32
    %1 = arith.extui %0 : i1 to i32
    %c0_i32_0 = arith.constant 0 : i32
    %2 = arith.cmpi ne, %1, %c0_i32_0 : i32
    scf.if %2 {
      %c0_20 = arith.constant 0 : index
      %c0_21 = arith.constant 0 : index
      %33 = vector.load %arg1[%c0_20, %c0_21] : memref<8x256xf32, #tpu.memory_space<vmem>>, vector<8x128xf32>
      %c0_22 = arith.constant 0 : index
      %c128 = arith.constant 128 : index
      %34 = vector.load %arg1[%c0_22, %c128] : memref<8x256xf32, #tpu.memory_space<vmem>>, vector<8x128xf32>
      %35 = arith.truncf %33 : vector<8x128xf32> to vector<8x128xbf16>
      %36 = arith.truncf %34 : vector<8x128xf32> to vector<8x128xbf16>
      %c0_23 = arith.constant 0 : index
      %c0_24 = arith.constant 0 : index
      %37 = vector.load %arg3[%c0_23, %c0_24] : memref<128x256xbf16, #tpu.memory_space<vmem>>, vector<128x256xbf16>
      %cst_25 = arith.constant dense<0.000000e+00> : vector<8x256xf32>
      %38 = tpu.matmul %35, %37, %cst_25 {dimension_numbers = #tpu.dot_dimension_numbers<[1], [0], [0], [1], [0, 0, 1, 1], [], []>} : vector<8x128xbf16>, vector<128x256xbf16>, vector<8x256xf32> -> vector<8x256xf32>
      %c0_26 = arith.constant 0 : index
      %c0_27 = arith.constant 0 : index
      %39 = vector.load %arg4[%c0_26, %c0_27] : memref<128x512xbf16, #tpu.memory_space<vmem>>, vector<128x512xbf16>
      %cst_28 = arith.constant dense<0.000000e+00> : vector<8x512xf32>
      %40 = tpu.matmul %36, %39, %cst_28 {dimension_numbers = #tpu.dot_dimension_numbers<[1], [0], [0], [1], [0, 0, 1, 1], [], []>} : vector<8x128xbf16>, vector<128x512xbf16>, vector<8x512xf32> -> vector<8x512xf32>
      %41 = vector.extract_strided_slice %38 {offsets = [0, 0], sizes = [8, 128], strides = [1, 1]} : vector<8x256xf32> to vector<8x128xf32>
      %42 = vector.extract_strided_slice %40 {offsets = [0, 0], sizes = [8, 128], strides = [1, 1]} : vector<8x512xf32> to vector<8x128xf32>
      %43 = arith.addf %41, %42 : vector<8x128xf32>
      %c0_29 = arith.constant 0 : index
      %c0_30 = arith.constant 0 : index
      %44 = vector.load %arg7[%c0_29, %c0_30] : memref<1x1024xf32, #tpu.memory_space<vmem>>, vector<1x128xf32>
      %45 = vector.broadcast %44 : vector<1x128xf32> to vector<8x128xf32>
      %46 = arith.addf %43, %45 : vector<8x128xf32>
      %cst_31 = arith.constant dense<0xFF800000> : vector<8xf32>
      %47 = vector.multi_reduction <maximumf>, %46, %cst_31 [1] : vector<8x128xf32> to vector<8xf32>
      %48 = vector.shape_cast %47 : vector<8xf32> to vector<8x1xf32>
      %49 = vector.broadcast %48 : vector<8x1xf32> to vector<8x128xf32>
      %50 = arith.subf %46, %49 : vector<8x128xf32>
      %51 = math.exp %50 : vector<8x128xf32>
      %cst_32 = arith.constant dense<0.000000e+00> : vector<8xf32>
      %52 = vector.multi_reduction <add>, %51, %cst_32 [1] : vector<8x128xf32> to vector<8xf32>
      %53 = vector.shape_cast %52 : vector<8xf32> to vector<8x1xf32>
      %54 = vector.broadcast %53 : vector<8x1xf32> to vector<8x128xf32>
      %55 = arith.divf %51, %54 : vector<8x128xf32>
      %56 = arith.truncf %55 : vector<8x128xf32> to vector<8x128xbf16>
      %c0_33 = arith.constant 0 : index
      %c0_34 = arith.constant 0 : index
      %57 = vector.load %arg2[%c0_33, %c0_34] : memref<128x128xbf16, #tpu.memory_space<vmem>>, vector<128x128xbf16>
      %cst_35 = arith.constant dense<0.000000e+00> : vector<8x128xf32>
      %58 = tpu.matmul %56, %57, %cst_35 {dimension_numbers = #tpu.dot_dimension_numbers<[1], [0], [0], [1], [0, 0, 1, 1], [], []>} : vector<8x128xbf16>, vector<128x128xbf16>, vector<8x128xf32> -> vector<8x128xf32>
      %59 = vector.extract_strided_slice %38 {offsets = [0, 128], sizes = [8, 128], strides = [1, 1]} : vector<8x256xf32> to vector<8x128xf32>
      %60 = arith.truncf %58 : vector<8x128xf32> to vector<8x128xbf16>
      %c0_36 = arith.constant 0 : index
      %c0_37 = arith.constant 0 : index
      %61 = vector.load %arg5[%c0_36, %c0_37] : memref<128x128xbf16, #tpu.memory_space<vmem>>, vector<128x128xbf16>
      %cst_38 = arith.constant dense<0.000000e+00> : vector<8x128xf32>
      %62 = tpu.matmul %60, %61, %cst_38 {dimension_numbers = #tpu.dot_dimension_numbers<[1], [0], [0], [1], [0, 0, 1, 1], [], []>} : vector<8x128xbf16>, vector<128x128xbf16>, vector<8x128xf32> -> vector<8x128xf32>
      %63 = arith.addf %59, %62 : vector<8x128xf32>
      %c0_39 = arith.constant 0 : index
      %c128_40 = arith.constant 128 : index
      %64 = vector.load %arg7[%c0_39, %c128_40] : memref<1x1024xf32, #tpu.memory_space<vmem>>, vector<1x128xf32>
      %65 = vector.broadcast %64 : vector<1x128xf32> to vector<8x128xf32>
      %66 = arith.addf %63, %65 : vector<8x128xf32>
      %cst_41 = arith.constant 0.000000e+00 : f32
      %67 = vector.broadcast %cst_41 : f32 to vector<8x128xf32>
      %68 = arith.maximumf %66, %67 : vector<8x128xf32>
      %69 = arith.truncf %68 : vector<8x128xf32> to vector<8x128xbf16>
      %c0_42 = arith.constant 0 : index
      %c0_43 = arith.constant 0 : index
      %70 = vector.load %arg6[%c0_42, %c0_43] : memref<128x384xbf16, #tpu.memory_space<vmem>>, vector<128x384xbf16>
      %cst_44 = arith.constant dense<0.000000e+00> : vector<8x384xf32>
      %71 = tpu.matmul %69, %70, %cst_44 {dimension_numbers = #tpu.dot_dimension_numbers<[1], [0], [0], [1], [0, 0, 1, 1], [], []>} : vector<8x128xbf16>, vector<128x384xbf16>, vector<8x384xf32> -> vector<8x384xf32>
      %c0_45 = arith.constant 0 : index
      %c256 = arith.constant 256 : index
      %72 = vector.load %arg7[%c0_45, %c256] : memref<1x1024xf32, #tpu.memory_space<vmem>>, vector<1x384xf32>
      %73 = vector.broadcast %72 : vector<1x384xf32> to vector<8x384xf32>
      %74 = arith.addf %71, %73 : vector<8x384xf32>
      %75 = vector.extract_strided_slice %40 {offsets = [0, 128], sizes = [8, 384], strides = [1, 1]} : vector<8x512xf32> to vector<8x384xf32>
      %c0_46 = arith.constant 0 : index
      %c640 = arith.constant 640 : index
      %76 = vector.load %arg7[%c0_46, %c640] : memref<1x1024xf32, #tpu.memory_space<vmem>>, vector<1x384xf32>
      %77 = vector.broadcast %76 : vector<1x384xf32> to vector<8x384xf32>
      %78 = arith.addf %75, %77 : vector<8x384xf32>
      %79 = vector.extract_strided_slice %74 {offsets = [0, 0], sizes = [8, 128], strides = [1, 1]} : vector<8x384xf32> to vector<8x128xf32>
      %80 = vector.extract_strided_slice %78 {offsets = [0, 0], sizes = [8, 128], strides = [1, 1]} : vector<8x384xf32> to vector<8x128xf32>
      %81 = arith.addf %79, %80 : vector<8x128xf32>
      %82 = arith.negf %81 : vector<8x128xf32>
      %83 = math.exp %82 : vector<8x128xf32>
      %cst_47 = arith.constant 1.000000e+00 : f32
      %84 = vector.broadcast %cst_47 : f32 to vector<8x128xf32>
      %85 = arith.addf %84, %83 : vector<8x128xf32>
      %86 = arith.divf %84, %85 : vector<8x128xf32>
      %87 = vector.extract_strided_slice %74 {offsets = [0, 128], sizes = [8, 128], strides = [1, 1]} : vector<8x384xf32> to vector<8x128xf32>
      %88 = vector.extract_strided_slice %78 {offsets = [0, 128], sizes = [8, 128], strides = [1, 1]} : vector<8x384xf32> to vector<8x128xf32>
      %89 = arith.addf %87, %88 : vector<8x128xf32>
      %90 = arith.negf %89 : vector<8x128xf32>
      %91 = math.exp %90 : vector<8x128xf32>
      %cst_48 = arith.constant 1.000000e+00 : f32
      %92 = vector.broadcast %cst_48 : f32 to vector<8x128xf32>
      %93 = arith.addf %92, %91 : vector<8x128xf32>
      %94 = arith.divf %92, %93 : vector<8x128xf32>
      %95 = vector.extract_strided_slice %74 {offsets = [0, 256], sizes = [8, 128], strides = [1, 1]} : vector<8x384xf32> to vector<8x128xf32>
      %96 = vector.extract_strided_slice %78 {offsets = [0, 256], sizes = [8, 128], strides = [1, 1]} : vector<8x384xf32> to vector<8x128xf32>
      %97 = arith.mulf %86, %96 : vector<8x128xf32>
      %98 = arith.addf %95, %97 : vector<8x128xf32>
      %99 = math.tanh %98 : vector<8x128xf32>
      %cst_49 = arith.constant 1.000000e+00 : f32
      %100 = vector.broadcast %cst_49 : f32 to vector<8x128xf32>
      %101 = arith.subf %100, %94 : vector<8x128xf32>
      %102 = arith.mulf %101, %99 : vector<8x128xf32>
      %103 = arith.mulf %94, %34 : vector<8x128xf32>
      %104 = arith.addf %102, %103 : vector<8x128xf32>
      %c0_50 = arith.constant 0 : index
      %c0_51 = arith.constant 0 : index
      %105 = vector.load %arg11[%c0_50, %c0_51] : memref<8x128xf32, #tpu.memory_space<vmem>>, vector<8x128xf32>
      tpu.vector_store %arg11[%c0_50, %c0_51], %104 {strides = array<i32>} : memref<8x128xf32, #tpu.memory_space<vmem>>, vector<8x128xf32>,
      %cst_52 = arith.constant 0xFF800000 : f32
      %106 = vector.broadcast %cst_52 : f32 to vector<8x1xf32>
      %c0_53 = arith.constant 0 : index
      %c0_54 = arith.constant 0 : index
      %107 = vector.load %arg13[%c0_53, %c0_54] : memref<8x1xf32, #tpu.memory_space<vmem>>, vector<8x1xf32>
      tpu.vector_store %arg13[%c0_53, %c0_54], %106 {strides = array<i32>} : memref<8x1xf32, #tpu.memory_space<vmem>>, vector<8x1xf32>,
      %cst_55 = arith.constant 0.000000e+00 : f32
      %108 = vector.broadcast %cst_55 : f32 to vector<8x1xf32>
      %c0_56 = arith.constant 0 : index
      %c0_57 = arith.constant 0 : index
      %109 = vector.load %arg14[%c0_56, %c0_57] : memref<8x1xf32, #tpu.memory_space<vmem>>, vector<8x1xf32>
      tpu.vector_store %arg14[%c0_56, %c0_57], %108 {strides = array<i32>} : memref<8x1xf32, #tpu.memory_space<vmem>>, vector<8x1xf32>,
      %c0_58 = arith.constant 0 : index
      %c128_59 = arith.constant 128 : index
      %110 = vector.load %arg10[%c0_58, %c128_59] : memref<8x384xf32, #tpu.memory_space<vmem>>, vector<8x128xf32>
      tpu.vector_store %arg10[%c0_58, %c128_59], %104 {strides = array<i32>} : memref<8x384xf32, #tpu.memory_space<vmem>>, vector<8x128xf32>,
      %c0_60 = arith.constant 0 : index
      %c256_61 = arith.constant 256 : index
      %111 = vector.load %arg10[%c0_60, %c256_61] : memref<8x384xf32, #tpu.memory_space<vmem>>, vector<8x128xf32>
      tpu.vector_store %arg10[%c0_60, %c256_61], %55 {strides = array<i32>} : memref<8x384xf32, #tpu.memory_space<vmem>>, vector<8x128xf32>,
    } else {
    }
    %c0 = arith.constant 0 : index
    %c0_1 = arith.constant 0 : index
    %3 = vector.load %arg11[%c0, %c0_1] : memref<8x128xf32, #tpu.memory_space<vmem>>, vector<8x128xf32>
    %4 = arith.truncf %3 : vector<8x128xf32> to vector<8x128xbf16>
    %c0_2 = arith.constant 0 : index
    %c0_3 = arith.constant 0 : index
    %5 = vector.load %arg8[%c0_2, %c0_3] : memref<128x128xbf16, #tpu.memory_space<vmem>>, vector<128x128xbf16>
    %cst = arith.constant dense<0.000000e+00> : vector<8x128xf32>
    %6 = tpu.matmul %4, %5, %cst {dimension_numbers = #tpu.dot_dimension_numbers<[1], [0], [0], [1], [0, 0, 1, 1], [], []>} : vector<8x128xbf16>, vector<128x128xbf16>, vector<8x128xf32> -> vector<8x128xf32>
    %c0_4 = arith.constant 0 : index
    %c0_5 = arith.constant 0 : index
    %7 = vector.load %arg9[%c0_4, %c0_5] : memref<1x128xf32, #tpu.memory_space<vmem>>, vector<1x128xf32>
    %8 = vector.broadcast %7 : vector<1x128xf32> to vector<8x128xf32>
    %9 = arith.addf %6, %8 : vector<8x128xf32>
    %10 = arith.index_cast %arg0 : i32 to index
    %c0_6 = arith.constant 0 : index
    %c0_7 = arith.constant 0 : index
    %11 = vector.load %arg12[%10, %c0_6, %c0_7] : memref<1x8x128xf32, #tpu.memory_space<vmem>>, vector<1x8x128xf32>
    %12 = vector.shape_cast %11 : vector<1x8x128xf32> to vector<8x128xf32>
    %13 = vector.shape_cast %9 : vector<8x128xf32> to vector<1x8x128xf32>
    tpu.vector_store %arg12[%10, %c0_6, %c0_7], %13 {strides = array<i32>} : memref<1x8x128xf32, #tpu.memory_space<vmem>>, vector<1x8x128xf32>,
    %c0_8 = arith.constant 0 : index
    %c0_9 = arith.constant 0 : index
    %14 = vector.load %arg13[%c0_8, %c0_9] : memref<8x1xf32, #tpu.memory_space<vmem>>, vector<8x1xf32>
    %cst_10 = arith.constant dense<0xFF800000> : vector<8xf32>
    %15 = vector.multi_reduction <maximumf>, %9, %cst_10 [1] : vector<8x128xf32> to vector<8xf32>
    %16 = vector.shape_cast %15 : vector<8xf32> to vector<8x1xf32>
    %17 = arith.maximumf %14, %16 : vector<8x1xf32>
    %c0_11 = arith.constant 0 : index
    %c0_12 = arith.constant 0 : index
    %18 = vector.load %arg14[%c0_11, %c0_12] : memref<8x1xf32, #tpu.memory_space<vmem>>, vector<8x1xf32>
    %19 = arith.subf %14, %17 : vector<8x1xf32>
    %20 = math.exp %19 : vector<8x1xf32>
    %21 = arith.mulf %18, %20 : vector<8x1xf32>
    %22 = vector.broadcast %17 : vector<8x1xf32> to vector<8x128xf32>
    %23 = arith.subf %9, %22 : vector<8x128xf32>
    %24 = math.exp %23 : vector<8x128xf32>
    %cst_13 = arith.constant dense<0.000000e+00> : vector<8xf32>
    %25 = vector.multi_reduction <add>, %24, %cst_13 [1] : vector<8x128xf32> to vector<8xf32>
    %26 = vector.shape_cast %25 : vector<8xf32> to vector<8x1xf32>
    %27 = arith.addf %21, %26 : vector<8x1xf32>
    %c0_14 = arith.constant 0 : index
    %c0_15 = arith.constant 0 : index
    %28 = vector.load %arg14[%c0_14, %c0_15] : memref<8x1xf32, #tpu.memory_space<vmem>>, vector<8x1xf32>
    tpu.vector_store %arg14[%c0_14, %c0_15], %27 {strides = array<i32>} : memref<8x1xf32, #tpu.memory_space<vmem>>, vector<8x1xf32>,
    %c0_16 = arith.constant 0 : index
    %c0_17 = arith.constant 0 : index
    %29 = vector.load %arg13[%c0_16, %c0_17] : memref<8x1xf32, #tpu.memory_space<vmem>>, vector<8x1xf32>
    tpu.vector_store %arg13[%c0_16, %c0_17], %17 {strides = array<i32>} : memref<8x1xf32, #tpu.memory_space<vmem>>, vector<8x1xf32>,
    %c0_i32_18 = arith.constant 0 : i32
    %30 = arith.cmpi eq, %arg0, %c0_i32_18 : i32
    %31 = arith.extui %30 : i1 to i32
    %c0_i32_19 = arith.constant 0 : i32
    %32 = arith.cmpi ne, %31, %c0_i32_19 : i32
    scf.if %32 {
      %c0_20 = arith.constant 0 : index
      %c0_21 = arith.constant 0 : index
      %33 = vector.load %arg13[%c0_20, %c0_21] : memref<8x1xf32, #tpu.memory_space<vmem>>, vector<8x1xf32>
      %c0_22 = arith.constant 0 : index
      %c0_23 = arith.constant 0 : index
      %34 = vector.load %arg14[%c0_22, %c0_23] : memref<8x1xf32, #tpu.memory_space<vmem>>, vector<8x1xf32>
      %35 = math.log %34 : vector<8x1xf32>
      %36 = arith.addf %33, %35 : vector<8x1xf32>
      %c0_24 = arith.constant 0 : index
      %c0_25 = arith.constant 0 : index
      %c0_26 = arith.constant 0 : index
      %37 = vector.load %arg12[%c0_24, %c0_25, %c0_26] : memref<1x8x128xf32, #tpu.memory_space<vmem>>, vector<1x8x128xf32>
      %38 = vector.shape_cast %37 : vector<1x8x128xf32> to vector<8x128xf32>
      %39 = vector.broadcast %36 : vector<8x1xf32> to vector<8x128xf32>
      %40 = arith.subf %38, %39 : vector<8x128xf32>
      %c0_27 = arith.constant 0 : index
      %c0_28 = arith.constant 0 : index
      %41 = vector.load %arg10[%c0_27, %c0_28] : memref<8x384xf32, #tpu.memory_space<vmem>>, vector<8x128xf32>
      tpu.vector_store %arg10[%c0_27, %c0_28], %40 {strides = array<i32>} : memref<8x384xf32, #tpu.memory_space<vmem>>, vector<8x128xf32>,
    } else {
    }
    return
  }
  func.func @transform_0(%arg0: i32) -> (i32, i32) {
    %c0_i32 = arith.constant 0 : i32
    %c0_i32_0 = arith.constant 0 : i32
    %c0_i32_1 = arith.constant 0 : i32
    return %c0_i32, %c0_i32_0 : i32, i32
  }
  func.func @transform_1(%arg0: i32) -> (i32, i32) {
    %c0_i32 = arith.constant 0 : i32
    %c0_i32_0 = arith.constant 0 : i32
    %c0_i32_1 = arith.constant 0 : i32
    return %c0_i32, %c0_i32_0 : i32, i32
  }
  func.func @transform_2(%arg0: i32) -> (i32, i32) {
    %c0_i32 = arith.constant 0 : i32
    %c0_i32_0 = arith.constant 0 : i32
    %c0_i32_1 = arith.constant 0 : i32
    return %c0_i32, %c0_i32_0 : i32, i32
  }
  func.func @transform_3(%arg0: i32) -> (i32, i32) {
    %c0_i32 = arith.constant 0 : i32
    %c0_i32_0 = arith.constant 0 : i32
    %c0_i32_1 = arith.constant 0 : i32
    return %c0_i32, %c0_i32_0 : i32, i32
  }
  func.func @transform_4(%arg0: i32) -> (i32, i32) {
    %c0_i32 = arith.constant 0 : i32
    %c0_i32_0 = arith.constant 0 : i32
    %c0_i32_1 = arith.constant 0 : i32
    return %c0_i32, %c0_i32_0 : i32, i32
  }
  func.func @transform_5(%arg0: i32) -> (i32, i32) {
    %c0_i32 = arith.constant 0 : i32
    %c0_i32_0 = arith.constant 0 : i32
    %c0_i32_1 = arith.constant 0 : i32
    return %c0_i32, %c0_i32_0 : i32, i32
  }
  func.func @transform_6(%arg0: i32) -> (i32, i32) {
    %c0_i32 = arith.constant 0 : i32
    %c0_i32_0 = arith.constant 0 : i32
    %c0_i32_1 = arith.constant 0 : i32
    return %c0_i32, %c0_i32_0 : i32, i32
  }
  func.func @transform_7(%arg0: i32) -> (i32, i32) {
    %c0_i32 = arith.constant 0 : i32
    %c0_i32_0 = arith.constant 0 : i32
    return %c0_i32, %arg0 : i32, i32
  }
  func.func @transform_8(%arg0: i32) -> (i32, i32) {
    %c0_i32 = arith.constant 0 : i32
    %c0_i32_0 = arith.constant 0 : i32
    return %c0_i32, %arg0 : i32, i32
  }
  func.func @transform_9(%arg0: i32) -> (i32, i32) {
    %c0_i32 = arith.constant 0 : i32
    %c0_i32_0 = arith.constant 0 : i32
    %c0_i32_1 = arith.constant 0 : i32
    return %c0_i32, %c0_i32_0 : i32, i32
  }
}

</mosaic_0001>

<llo_original>
// kernel: tpu_custom_call.1
$region0: #{tpu_custom_call.1}
  #allocation0 [shape = 'u32[]', space=smem, size = 0x4, offset = 0x4, fixed_abs, tag = 'smem constant byte address 0x4 - core index']
  #allocation1 [shape = 'u32[144,128]{1,0:T(1,128)}', space=vmem, size = 0x12000, scoped, tag = 'internal scratch']
  #allocation2 [shape = 'f32[8,128]{1,0:T(8,128)}', space=vmem, size = 0x1000, scoped, tag = 'scratch operand']
  #allocation3 [shape = 'f32[1,8,128]{2,1,0:T(8,128)}', space=vmem, size = 0x1000, scoped, tag = 'scratch operand']
  #allocation4 [shape = 'f32[8,1]{1,0:T(8,128)}', space=vmem, size = 0x1000, scoped, tag = 'scratch operand']
  #allocation5 [shape = 'f32[8,1]{1,0:T(8,128)}', space=vmem, size = 0x1000, scoped, tag = 'scratch operand']
  %s0 = inlined_call_operand.hbm [shape: f32[8,256], index: 0, kind: input, shape index: {}]
  %s1 = inlined_call_operand.hbm [shape: bf16[128,128], index: 1, kind: input, shape index: {}]
  %s2 = inlined_call_operand.hbm [shape: bf16[128,256], index: 2, kind: input, shape index: {}]
  %s3 = inlined_call_operand.hbm [shape: bf16[128,512], index: 3, kind: input, shape index: {}]
  %s4 = inlined_call_operand.hbm [shape: bf16[128,128], index: 4, kind: input, shape index: {}]
  %s5 = inlined_call_operand.hbm [shape: bf16[128,384], index: 5, kind: input, shape index: {}]
  %s6 = inlined_call_operand.vmem [shape: f32[1,1024], index: 6, kind: input, shape index: {}]
  %s7 = inlined_call_operand.hbm [shape: bf16[128,128], index: 7, kind: input, shape index: {}]
  %s8 = inlined_call_operand.vmem [shape: f32[1,128], index: 8, kind: input, shape index: {}]
  %s9 = inlined_call_operand.hbm [shape: f32[8,384], index: 9, kind: output, shape index: {}]
  %s10 = sld [smem:[#allocation0]]
  $region82: #{tpu_custom_call.1} parent=0
    _
  %s12 = ssub.s32 1, %s10
  %s13 = scalar_select 0, %s12, %s10
  $region1: #{tpu_custom_call.1} parent=0
    #allocation6 [shape = 'u8[8192]{0}', space=vmem, size = 0x2000, scoped, tag = 'input window, operand 0, single buffered']
    #allocation7 [shape = 's32[1]{0}', space=sflag, size = 0x4, scoped, tag = 'scoped memory for tpu_custom_call.1']
    #allocation8 [shape = 's32[1]{0}', space=sflag, size = 0x4, scoped, tag = 'scoped memory for tpu_custom_call.1']
    #allocation9 [shape = 'u8[32768]{0}', space=vmem, size = 0x8000, scoped, tag = 'input window, operand 1, single buffered']
    #allocation10 [shape = 's32[1]{0}', space=sflag, size = 0x4, scoped, tag = 'scoped memory for tpu_custom_call.1']
    #allocation11 [shape = 'u8[65536]{0}', space=vmem, size = 0x10000, scoped, tag = 'input window, operand 2, single buffered']
    #allocation12 [shape = 'u8[131072]{0}', space=vmem, size = 0x20000, scoped, tag = 'input window, operand 3, single buffered']
    #allocation13 [shape = 's32[1]{0}', space=sflag, size = 0x4, scoped, tag = 'scoped memory for tpu_custom_call.1']
    #allocation14 [shape = 'u8[32768]{0}', space=vmem, size = 0x8000, scoped, tag = 'input window, operand 4, single buffered']
    #allocation15 [shape = 'u8[98304]{0}', space=vmem, size = 0x18000, scoped, tag = 'input window, operand 5, single buffered']
    #allocation16 [shape = 's32[1]{0}', space=sflag, size = 0x4, scoped, tag = 'scoped memory for tpu_custom_call.1']
    #allocation17 [shape = 'u8[32768]{0}', space=vmem, size = 0x8000, scoped, tag = 'input window, operand 7, single buffered']
    #allocation18 [shape = 'u8[12288]{0}', space=vmem, size = 0x3000, scoped, tag = 'output window, operand 0, single buffered']
    %14 = vsyncpa [#allocation7], 0
    %15 = vsyncpa [#allocation10], 0
    %16 = vsyncpa [#allocation13], 0
    %17 = vsyncpa [#allocation16], 0
    %18 = vsyncpa [#allocation8], 0
    // Predicated region
    $region2: #{tpu_custom_call.1} parent=1 // pred_check
      _
    $region3: #{tpu_custom_call.1} parent=1 // pred_check_branch
      %20 = sbr.rel (0) target = $region5
    $region4: #{tpu_custom_call.1} parent=1 // pred_region
      %s22 = ssub.s32 256, 256
      %23 = vsyncadd [#allocation7], %s22
      %s25 = sshll.u32 [#allocation6], 4
      %s26 = int_to_ptr.vmem [resolvable:$true] %s25
      %28 = dma.hbm_to_vmem [thread:$0]  %s0, 256, %s26, [#allocation7]
    $region5: #{tpu_custom_call.1} parent=1 // pred_fallthru
      _
    // Predicated region
    $region6: #{tpu_custom_call.1} parent=1 // pred_check
      _
    $region7: #{tpu_custom_call.1} parent=1 // pred_check_branch
      %30 = sbr.rel (0) target = $region9
    $region8: #{tpu_custom_call.1} parent=1 // pred_region
      %s32 = ssub.s32 1024, 1024
      %33 = vsyncadd [#allocation10], %s32
      %s34 = sshll.u32 [#allocation9], 4
      %s35 = int_to_ptr.vmem [resolvable:$true] %s34
      %40 = dma.hbm_to_vmem [thread:$0]  %s1, 1024, %s35, [#allocation10], 64, 64, 4
    $region9: #{tpu_custom_call.1} parent=1 // pred_fallthru
      _
    // Predicated region
    $region10: #{tpu_custom_call.1} parent=1 // pred_check
      _
    $region11: #{tpu_custom_call.1} parent=1 // pred_check_branch
      %42 = sbr.rel (0) target = $region13
    $region12: #{tpu_custom_call.1} parent=1 // pred_region
      %s44 = ssub.s32 2048, 2048
      %45 = vsyncadd [#allocation10], %s44
      %s46 = sshll.u32 [#allocation11], 4
      %s47 = int_to_ptr.vmem [resolvable:$true] %s46
      %52 = dma.hbm_to_vmem [thread:$0]  %s2, 2048, %s47, [#allocation10], 128, 128, 8
    $region13: #{tpu_custom_call.1} parent=1 // pred_fallthru
      _
    // Predicated region
    $region14: #{tpu_custom_call.1} parent=1 // pred_check
      _
    $region15: #{tpu_custom_call.1} parent=1 // pred_check_branch
      %54 = sbr.rel (0) target = $region17
    $region16: #{tpu_custom_call.1} parent=1 // pred_region
      %s56 = ssub.s32 4096, 4096
      %57 = vsyncadd [#allocation13], %s56
      %s58 = sshll.u32 [#allocation12], 4
      %s59 = int_to_ptr.vmem [resolvable:$true] %s58
      %64 = dma.hbm_to_vmem [thread:$0]  %s3, 4096, %s59, [#allocation13], 256, 256, 16
    $region17: #{tpu_custom_call.1} parent=1 // pred_fallthru
      _
    // Predicated region
    $region18: #{tpu_custom_call.1} parent=1 // pred_check
      _
    $region19: #{tpu_custom_call.1} parent=1 // pred_check_branch
      %66 = sbr.rel (0) target = $region21
    $region20: #{tpu_custom_call.1} parent=1 // pred_region
      %s68 = ssub.s32 1024, 1024
      %69 = vsyncadd [#allocation13], %s68
      %s70 = sshll.u32 [#allocation14], 4
      %s71 = int_to_ptr.vmem [resolvable:$true] %s70
      %76 = dma.hbm_to_vmem [thread:$0]  %s4, 1024, %s71, [#allocation13], 64, 64, 4
    $region21: #{tpu_custom_call.1} parent=1 // pred_fallthru
      _
    // Predicated region
    $region22: #{tpu_custom_call.1} parent=1 // pred_check
      _
    $region23: #{tpu_custom_call.1} parent=1 // pred_check_branch
      %78 = sbr.rel (0) target = $region25
    $region24: #{tpu_custom_call.1} parent=1 // pred_region
      %s80 = ssub.s32 3072, 3072
      %81 = vsyncadd [#allocation16], %s80
      %s82 = sshll.u32 [#allocation15], 4
      %s83 = int_to_ptr.vmem [resolvable:$true] %s82
      %88 = dma.hbm_to_vmem [thread:$0]  %s5, 3072, %s83, [#allocation16], 192, 192, 12
    $region25: #{tpu_custom_call.1} parent=1 // pred_fallthru
      _
    // Predicated region
    $region26: #{tpu_custom_call.1} parent=1 // pred_check
      _
    $region27: #{tpu_custom_call.1} parent=1 // pred_check_branch
      %90 = sbr.rel (0) target = $region29
    $region28: #{tpu_custom_call.1} parent=1 // pred_region
      _
    $region29: #{tpu_custom_call.1} parent=1 // pred_fallthru
      _
    // Predicated region
    $region30: #{tpu_custom_call.1} parent=1 // pred_check
      _
    $region31: #{tpu_custom_call.1} parent=1 // pred_check_branch
      %92 = sbr.rel (0) target = $region33
    $region32: #{tpu_custom_call.1} parent=1 // pred_region
      %s94 = ssub.s32 1024, 1024
      %95 = vsyncadd [#allocation16], %s94
      %s96 = sshll.u32 [#allocation17], 4
      %s97 = int_to_ptr.vmem [resolvable:$true] %s96
      %102 = dma.hbm_to_vmem [thread:$0]  %s7, 1024, %s97, [#allocation16], 64, 64, 4
    $region33: #{tpu_custom_call.1} parent=1 // pred_fallthru
      _
    // Predicated region
    $region34: #{tpu_custom_call.1} parent=1 // pred_check
      _
    $region35: #{tpu_custom_call.1} parent=1 // pred_check_branch
      %104 = sbr.rel (0) target = $region37
    $region36: #{tpu_custom_call.1} parent=1 // pred_region
      _
    $region37: #{tpu_custom_call.1} parent=1 // pred_fallthru
      _
    // Predicated region
    $region38: #{tpu_custom_call.1} parent=1 // pred_check
      _
    $region39: #{tpu_custom_call.1} parent=1 // pred_check_branch
      %106 = sbr.rel (0) target = $region41
    $region40: #{tpu_custom_call.1} parent=1 // pred_region
      %107 = dma.done [#allocation7], 256
    $region41: #{tpu_custom_call.1} parent=1 // pred_fallthru
      _
    // Predicated region
    $region42: #{tpu_custom_call.1} parent=1 // pred_check
      _
    $region43: #{tpu_custom_call.1} parent=1 // pred_check_branch
      %109 = sbr.rel (0) target = $region45
    $region44: #{tpu_custom_call.1} parent=1 // pred_region
      %110 = dma.done [#allocation10], 1024
    $region45: #{tpu_custom_call.1} parent=1 // pred_fallthru
      _
    // Predicated region
    $region46: #{tpu_custom_call.1} parent=1 // pred_check
      _
    $region47: #{tpu_custom_call.1} parent=1 // pred_check_branch
      %112 = sbr.rel (0) target = $region49
    $region48: #{tpu_custom_call.1} parent=1 // pred_region
      %113 = dma.done [#allocation10], 2048
    $region49: #{tpu_custom_call.1} parent=1 // pred_fallthru
      _
    // Predicated region
    $region50: #{tpu_custom_call.1} parent=1 // pred_check
      _
    $region51: #{tpu_custom_call.1} parent=1 // pred_check_branch
      %115 = sbr.rel (0) target = $region53
    $region52: #{tpu_custom_call.1} parent=1 // pred_region
      %116 = dma.done [#allocation13], 4096
    $region53: #{tpu_custom_call.1} parent=1 // pred_fallthru
      _
    // Predicated region
    $region54: #{tpu_custom_call.1} parent=1 // pred_check
      _
    $region55: #{tpu_custom_call.1} parent=1 // pred_check_branch
      %118 = sbr.rel (0) target = $region57
    $region56: #{tpu_custom_call.1} parent=1 // pred_region
      %119 = dma.done [#allocation13], 1024
    $region57: #{tpu_custom_call.1} parent=1 // pred_fallthru
      _
    // Predicated region
    $region58: #{tpu_custom_call.1} parent=1 // pred_check
      _
    $region59: #{tpu_custom_call.1} parent=1 // pred_check_branch
      %121 = sbr.rel (0) target = $region61
    $region60: #{tpu_custom_call.1} parent=1 // pred_region
      %122 = dma.done [#allocation16], 3072
    $region61: #{tpu_custom_call.1} parent=1 // pred_fallthru
      _
    // Predicated region
    $region62: #{tpu_custom_call.1} parent=1 // pred_check
      _
    $region63: #{tpu_custom_call.1} parent=1 // pred_check_branch
      %124 = sbr.rel (0) target = $region65
    $region64: #{tpu_custom_call.1} parent=1 // pred_region
      %125 = dma.done [#allocation16], 1024
    $region65: #{tpu_custom_call.1} parent=1 // pred_fallthru
      _
    %p127 = scmp.eq.s32.totalorder 0, 0
    // Predicated region
    $region66: #{tpu_custom_call.1} parent=1 // pred_check
      %p128 = pneg %p127
    $region67: #{tpu_custom_call.1} parent=1 // pred_check_branch
      %130 = sbr.rel (%p128) target = $region69
    $region68: #{tpu_custom_call.1} parent=1 // pred_region
      %v131 = vld [vmem:[#allocation6] sm:$0xff]
      %v132 = vld [vmem:[#allocation6 + $0x8] sm:$0xff]
      %v133 = vpack.c.bf16 %v131, %v131
      %v134 = vpack.c.bf16 %v132, %v132
      %v135 = vld [vmem:[#allocation11] sm:$0xff]
      %v136 = vld [vmem:[#allocation11 + $0x8] sm:$0xff]
      %v137 = vld [vmem:[#allocation11 + $0x10] sm:$0xff]
      %v138 = vld [vmem:[#allocation11 + $0x18] sm:$0xff]
      %v139 = vld [vmem:[#allocation11 + $0x20] sm:$0xff]
      %v140 = vld [vmem:[#allocation11 + $0x28] sm:$0xff]
      %v141 = vld [vmem:[#allocation11 + $0x30] sm:$0xff]
      %v142 = vld [vmem:[#allocation11 + $0x38] sm:$0xff]
      %v143 = vld [vmem:[#allocation11 + $0x40] sm:$0xff]
      %v144 = vld [vmem:[#allocation11 + $0x48] sm:$0xff]
      %v145 = vld [vmem:[#allocation11 + $0x50] sm:$0xff]
      %v146 = vld [vmem:[#allocation11 + $0x58] sm:$0xff]
      %v147 = vld [vmem:[#allocation11 + $0x60] sm:$0xff]
      %v148 = vld [vmem:[#allocation11 + $0x68] sm:$0xff]
      %v149 = vld [vmem:[#allocation11 + $0x70] sm:$0xff]
      %v150 = vld [vmem:[#allocation11 + $0x78] sm:$0xff]
      %v167 = vunpack.c.l.b16 %v135
      %v168 = vunpack.c.h.b16 %v135
      %v169 = vunpack.c.l.b16 %v136
      %v170 = vunpack.c.h.b16 %v136
      %v171 = vunpack.c.l.b16 %v137
      %v172 = vunpack.c.h.b16 %v137
      %v173 = vunpack.c.l.b16 %v138
      %v174 = vunpack.c.h.b16 %v138
      %v175 = vunpack.c.l.b16 %v139
      %v176 = vunpack.c.h.b16 %v139
      %v177 = vunpack.c.l.b16 %v140
      %v178 = vunpack.c.h.b16 %v140
      %v179 = vunpack.c.l.b16 %v141
      %v180 = vunpack.c.h.b16 %v141
      %v181 = vunpack.c.l.b16 %v142
      %v182 = vunpack.c.h.b16 %v142
      %v183 = vunpack.c.l.b16 %v143
      %v184 = vunpack.c.h.b16 %v143
      %v185 = vunpack.c.l.b16 %v144
      %v186 = vunpack.c.h.b16 %v144
      %v187 = vunpack.c.l.b16 %v145
      %v188 = vunpack.c.h.b16 %v145
      %v189 = vunpack.c.l.b16 %v146
      %v190 = vunpack.c.h.b16 %v146
      %v191 = vunpack.c.l.b16 %v147
      %v192 = vunpack.c.h.b16 %v147
      %v193 = vunpack.c.l.b16 %v148
      %v194 = vunpack.c.h.b16 %v148
      %v195 = vunpack.c.l.b16 %v149
      %v196 = vunpack.c.h.b16 %v149
      %v197 = vunpack.c.l.b16 %v150
      %v198 = vunpack.c.h.b16 %v150
      %v199 = vpack.c.b16 %v169, %v167
      %v200 = vpack.c.b16 %v170, %v168
      %v201 = vpack.c.b16 %v173, %v171
      %v202 = vpack.c.b16 %v174, %v172
      %v203 = vpack.c.b16 %v177, %v175
      %v204 = vpack.c.b16 %v178, %v176
      %v205 = vpack.c.b16 %v181, %v179
      %v206 = vpack.c.b16 %v182, %v180
      %v207 = vpack.c.b16 %v185, %v183
      %v208 = vpack.c.b16 %v186, %v184
      %v209 = vpack.c.b16 %v189, %v187
      %v210 = vpack.c.b16 %v190, %v188
      %v211 = vpack.c.b16 %v193, %v191
      %v212 = vpack.c.b16 %v194, %v192
      %v213 = vpack.c.b16 %v197, %v195
      %v214 = vpack.c.b16 %v198, %v196
      %231 = vmatprep.subr.bf16.mxu0 %v200
      %232 = vmatpush1.bf16.msra.mxu0 %v199
      %233 = vmatprep.subr.bf16.mxu0 %v202
      %234 = vmatpush1.bf16.msra.mxu0 %v201
      %235 = vmatprep.subr.bf16.mxu0 %v204
      %236 = vmatpush1.bf16.msra.mxu0 %v203
      %237 = vmatprep.subr.bf16.mxu0 %v206
      %238 = vmatpush1.bf16.msra.mxu0 %v205
      %239 = vmatprep.subr.bf16.mxu0 %v208
      %240 = vmatpush1.bf16.msra.mxu0 %v207
      %241 = vmatprep.subr.bf16.mxu0 %v210
      %242 = vmatpush1.bf16.msra.mxu0 %v209
      %243 = vmatprep.subr.bf16.mxu0 %v212
      %244 = vmatpush1.bf16.msra.mxu0 %v211
      %245 = vmatprep.subr.bf16.mxu0 %v214
      %246 = vmatpush1.bf16.msra.mxu0 %v213
      %247 = vmatprep.subr.bf16.mxu0 0
      %248 = vmatpush1.bf16.msra.mxu0 0
      %249 = vmatprep.subr.bf16.mxu0 0
      %250 = vmatpush1.bf16.msra.mxu0 0
      %251 = vmatprep.subr.bf16.mxu0 0
      %252 = vmatpush1.bf16.msra.mxu0 0
      %253 = vmatprep.subr.bf16.mxu0 0
      %254 = vmatpush1.bf16.msra.mxu0 0
      %255 = vmatprep.subr.bf16.mxu0 0
      %256 = vmatpush1.bf16.msra.mxu0 0
      %257 = vmatprep.subr.bf16.mxu0 0
      %258 = vmatpush1.bf16.msra.mxu0 0
      %259 = vmatprep.subr.bf16.mxu0 0
      %260 = vmatpush1.bf16.msra.mxu0 0
      %261 = vmatprep.subr.bf16.mxu0 0
      %262 = vmatpush1.bf16.msra.mxu0 0
      %263 = vmatprep.mubr.bf16.mxu0 0
      %264 = vmatmul.mubr.bf16.gmra.mrb[0].mxu0 %v133
      %v265 = vpop.f32.mrb[0].mxu0
      %v266 = vadd.f32 0.0, %v265
      %v267 = vpop.f32.mrb[0].mxu0
      %v268 = vadd.f32 0.0, %v267
      %v269 = vpop.f32.mrb[0].mxu0
      %v270 = vpop.f32.mrb[0].mxu0
      %271 = vdwg.mxu0
      %v272 = vld [vmem:[#allocation12] sm:$0xff]
      %v273 = vld [vmem:[#allocation12 + $0x8] sm:$0xff]
      %v274 = vld [vmem:[#allocation12 + $0x10] sm:$0xff]
      %v275 = vld [vmem:[#allocation12 + $0x18] sm:$0xff]
      %v276 = vld [vmem:[#allocation12 + $0x20] sm:$0xff]
      %v277 = vld [vmem:[#allocation12 + $0x28] sm:$0xff]
      %v278 = vld [vmem:[#allocation12 + $0x30] sm:$0xff]
      %v279 = vld [vmem:[#allocation12 + $0x38] sm:$0xff]
      %v280 = vld [vmem:[#allocation12 + $0x40] sm:$0xff]
      %v281 = vld [vmem:[#allocation12 + $0x48] sm:$0xff]
      %v282 = vld [vmem:[#allocation12 + $0x50] sm:$0xff]
      %v283 = vld [vmem:[#allocation12 + $0x58] sm:$0xff]
      %v284 = vld [vmem:[#allocation12 + $0x60] sm:$0xff]
      %v285 = vld [vmem:[#allocation12 + $0x68] sm:$0xff]
      %v286 = vld [vmem:[#allocation12 + $0x70] sm:$0xff]
      %v287 = vld [vmem:[#allocation12 + $0x78] sm:$0xff]
      %v288 = vld [vmem:[#allocation12 + $0x80] sm:$0xff]
      %v289 = vld [vmem:[#allocation12 + $0x88] sm:$0xff]
      %v290 = vld [vmem:[#allocation12 + $0x90] sm:$0xff]
      %v291 = vld [vmem:[#allocation12 + $0x98] sm:$0xff]
      %v292 = vld [vmem:[#allocation12 + $0xa0] sm:$0xff]
      %v293 = vld [vmem:[#allocation12 + $0xa8] sm:$0xff]
      %v294 = vld [vmem:[#allocation12 + $0xb0] sm:$0xff]
      %v295 = vld [vmem:[#allocation12 + $0xb8] sm:$0xff]
      %v296 = vld [vmem:[#allocation12 + $0xc0] sm:$0xff]
      %v297 = vld [vmem:[#allocation12 + $0xc8] sm:$0xff]
      %v298 = vld [vmem:[#allocation12 + $0xd0] sm:$0xff]
      %v299 = vld [vmem:[#allocation12 + $0xd8] sm:$0xff]
      %v300 = vld [vmem:[#allocation12 + $0xe0] sm:$0xff]
      %v301 = vld [vmem:[#allocation12 + $0xe8] sm:$0xff]
      %v302 = vld [vmem:[#allocation12 + $0xf0] sm:$0xff]
      %v303 = vld [vmem:[#allocation12 + $0xf8] sm:$0xff]
      %v336 = vunpack.c.l.b16 %v272
      %v337 = vunpack.c.h.b16 %v272
      %v338 = vunpack.c.l.b16 %v273
      %v339 = vunpack.c.h.b16 %v273
      %v340 = vunpack.c.l.b16 %v274
      %v341 = vunpack.c.h.b16 %v274
      %v342 = vunpack.c.l.b16 %v275
      %v343 = vunpack.c.h.b16 %v275
      %v344 = vunpack.c.l.b16 %v276
      %v345 = vunpack.c.h.b16 %v276
      %v346 = vunpack.c.l.b16 %v277
      %v347 = vunpack.c.h.b16 %v277
      %v348 = vunpack.c.l.b16 %v278
      %v349 = vunpack.c.h.b16 %v278
      %v350 = vunpack.c.l.b16 %v279
      %v351 = vunpack.c.h.b16 %v279
      %v352 = vunpack.c.l.b16 %v280
      %v353 = vunpack.c.h.b16 %v280
      %v354 = vunpack.c.l.b16 %v281
      %v355 = vunpack.c.h.b16 %v281
      %v356 = vunpack.c.l.b16 %v282
      %v357 = vunpack.c.h.b16 %v282
      %v358 = vunpack.c.l.b16 %v283
      %v359 = vunpack.c.h.b16 %v283
      %v360 = vunpack.c.l.b16 %v284
      %v361 = vunpack.c.h.b16 %v284
      %v362 = vunpack.c.l.b16 %v285
      %v363 = vunpack.c.h.b16 %v285
      %v364 = vunpack.c.l.b16 %v286
      %v365 = vunpack.c.h.b16 %v286
      %v366 = vunpack.c.l.b16 %v287
      %v367 = vunpack.c.h.b16 %v287
      %v368 = vunpack.c.l.b16 %v288
      %v369 = vunpack.c.h.b16 %v288
      %v370 = vunpack.c.l.b16 %v289
      %v371 = vunpack.c.h.b16 %v289
      %v372 = vunpack.c.l.b16 %v290
      %v373 = vunpack.c.h.b16 %v290
      %v374 = vunpack.c.l.b16 %v291
      %v375 = vunpack.c.h.b16 %v291
      %v376 = vunpack.c.l.b16 %v292
      %v377 = vunpack.c.h.b16 %v292
      %v378 = vunpack.c.l.b16 %v293
      %v379 = vunpack.c.h.b16 %v293
      %v380 = vunpack.c.l.b16 %v294
      %v381 = vunpack.c.h.b16 %v294
      %v382 = vunpack.c.l.b16 %v295
      %v383 = vunpack.c.h.b16 %v295
      %v384 = vunpack.c.l.b16 %v296
      %v385 = vunpack.c.h.b16 %v296
      %v386 = vunpack.c.l.b16 %v297
      %v387 = vunpack.c.h.b16 %v297
      %v388 = vunpack.c.l.b16 %v298
      %v389 = vunpack.c.h.b16 %v298
      %v390 = vunpack.c.l.b16 %v299
      %v391 = vunpack.c.h.b16 %v299
      %v392 = vunpack.c.l.b16 %v300
      %v393 = vunpack.c.h.b16 %v300
      %v394 = vunpack.c.l.b16 %v301
      %v395 = vunpack.c.h.b16 %v301
      %v396 = vunpack.c.l.b16 %v302
      %v397 = vunpack.c.h.b16 %v302
      %v398 = vunpack.c.l.b16 %v303
      %v399 = vunpack.c.h.b16 %v303
      %v400 = vpack.c.b16 %v340, %v336
      %v401 = vpack.c.b16 %v341, %v337
      %v402 = vpack.c.b16 %v342, %v338
      %v403 = vpack.c.b16 %v343, %v339
      %v404 = vpack.c.b16 %v348, %v344
      %v405 = vpack.c.b16 %v349, %v345
      %v406 = vpack.c.b16 %v350, %v346
      %v407 = vpack.c.b16 %v351, %v347
      %v408 = vpack.c.b16 %v356, %v352
      %v409 = vpack.c.b16 %v357, %v353
      %v410 = vpack.c.b16 %v358, %v354
      %v411 = vpack.c.b16 %v359, %v355
      %v412 = vpack.c.b16 %v364, %v360
      %v413 = vpack.c.b16 %v365, %v361
      %v414 = vpack.c.b16 %v366, %v362
      %v415 = vpack.c.b16 %v367, %v363
      %v416 = vpack.c.b16 %v372, %v368
      %v417 = vpack.c.b16 %v373, %v369
      %v418 = vpack.c.b16 %v374, %v370
      %v419 = vpack.c.b16 %v375, %v371
      %v420 = vpack.c.b16 %v380, %v376
      %v421 = vpack.c.b16 %v381, %v377
      %v422 = vpack.c.b16 %v382, %v378
      %v423 = vpack.c.b16 %v383, %v379
      %v424 = vpack.c.b16 %v388, %v384
      %v425 = vpack.c.b16 %v389, %v385
      %v426 = vpack.c.b16 %v390, %v386
      %v427 = vpack.c.b16 %v391, %v387
      %v428 = vpack.c.b16 %v396, %v392
      %v429 = vpack.c.b16 %v397, %v393
      %v430 = vpack.c.b16 %v398, %v394
      %v431 = vpack.c.b16 %v399, %v395
      %464 = vmatprep.subr.bf16.mxu0 %v401
      %465 = vmatpush1.bf16.msra.mxu0 %v400
      %466 = vmatprep.subr.bf16.mxu0 %v405
      %467 = vmatpush1.bf16.msra.mxu0 %v404
      %468 = vmatprep.subr.bf16.mxu0 %v409
      %469 = vmatpush1.bf16.msra.mxu0 %v408
      %470 = vmatprep.subr.bf16.mxu0 %v413
      %471 = vmatpush1.bf16.msra.mxu0 %v412
      %472 = vmatprep.subr.bf16.mxu0 %v417
      %473 = vmatpush1.bf16.msra.mxu0 %v416
      %474 = vmatprep.subr.bf16.mxu0 %v421
      %475 = vmatpush1.bf16.msra.mxu0 %v420
      %476 = vmatprep.subr.bf16.mxu0 %v425
      %477 = vmatpush1.bf16.msra.mxu0 %v424
      %478 = vmatprep.subr.bf16.mxu0 %v429
      %479 = vmatpush1.bf16.msra.mxu0 %v428
      %480 = vmatprep.subr.bf16.mxu0 0
      %481 = vmatpush1.bf16.msra.mxu0 0
      %482 = vmatprep.subr.bf16.mxu0 0
      %483 = vmatpush1.bf16.msra.mxu0 0
      %484 = vmatprep.subr.bf16.mxu0 0
      %485 = vmatpush1.bf16.msra.mxu0 0
      %486 = vmatprep.subr.bf16.mxu0 0
      %487 = vmatpush1.bf16.msra.mxu0 0
      %488 = vmatprep.subr.bf16.mxu0 0
      %489 = vmatpush1.bf16.msra.mxu0 0
      %490 = vmatprep.subr.bf16.mxu0 0
      %491 = vmatpush1.bf16.msra.mxu0 0
      %492 = vmatprep.subr.bf16.mxu0 0
      %493 = vmatpush1.bf16.msra.mxu0 0
      %494 = vmatprep.subr.bf16.mxu0 0
      %495 = vmatpush1.bf16.msra.mxu0 0
      %496 = vmatprep.mubr.bf16.mxu0 0
      %497 = vmatmul.mubr.bf16.gmra.mrb[0].mxu0 %v134
      %v498 = vpop.f32.mrb[0].mxu0
      %v499 = vadd.f32 0.0, %v498
      %v500 = vpop.f32.mrb[0].mxu0
      %v501 = vadd.f32 0.0, %v500
      %v502 = vpop.f32.mrb[0].mxu0
      %v503 = vpop.f32.mrb[0].mxu0
      %504 = vdwg.mxu0
      %505 = vmatprep.subr.bf16.mxu0 %v403
      %506 = vmatpush1.bf16.msra.mxu0 %v402
      %507 = vmatprep.subr.bf16.mxu0 %v407
      %508 = vmatpush1.bf16.msra.mxu0 %v406
      %509 = vmatprep.subr.bf16.mxu0 %v411
      %510 = vmatpush1.bf16.msra.mxu0 %v410
      %511 = vmatprep.subr.bf16.mxu0 %v415
      %512 = vmatpush1.bf16.msra.mxu0 %v414
      %513 = vmatprep.subr.bf16.mxu0 %v419
      %514 = vmatpush1.bf16.msra.mxu0 %v418
      %515 = vmatprep.subr.bf16.mxu0 %v423
      %516 = vmatpush1.bf16.msra.mxu0 %v422
      %517 = vmatprep.subr.bf16.mxu0 %v427
      %518 = vmatpush1.bf16.msra.mxu0 %v426
      %519 = vmatprep.subr.bf16.mxu0 %v431
      %520 = vmatpush1.bf16.msra.mxu0 %v430
      %521 = vmatprep.subr.bf16.mxu0 0
      %522 = vmatpush1.bf16.msra.mxu0 0
      %523 = vmatprep.subr.bf16.mxu0 0
      %524 = vmatpush1.bf16.msra.mxu0 0
      %525 = vmatprep.subr.bf16.mxu0 0
      %526 = vmatpush1.bf16.msra.mxu0 0
      %527 = vmatprep.subr.bf16.mxu0 0
      %528 = vmatpush1.bf16.msra.mxu0 0
      %529 = vmatprep.subr.bf16.mxu0 0
      %530 = vmatpush1.bf16.msra.mxu0 0
      %531 = vmatprep.subr.bf16.mxu0 0
      %532 = vmatpush1.bf16.msra.mxu0 0
      %533 = vmatprep.subr.bf16.mxu0 0
      %534 = vmatpush1.bf16.msra.mxu0 0
      %535 = vmatprep.subr.bf16.mxu0 0
      %536 = vmatpush1.bf16.msra.mxu0 0
      %537 = vmatprep.mubr.bf16.mxu0 0
      %538 = vmatmul.mubr.bf16.gmra.mrb[0].mxu0 %v134
      %v539 = vpop.f32.mrb[0].mxu0
      %v540 = vadd.f32 0.0, %v539
      %v541 = vpop.f32.mrb[0].mxu0
      %v542 = vadd.f32 0.0, %v541
      %v543 = vpop.f32.mrb[0].mxu0
      %v544 = vpop.f32.mrb[0].mxu0
      %545 = vdwg.mxu0
      %v546 = vadd.f32 %v266, %v499
      %v547 = vld [vmem:[%s6] sm:$0x1]
      %v549 = vlaneseq
      %v550 = vshrl.u32 %v549, 7
      %v551 = vsub.s32 0, %v550
      %v552 = vrot.slane %v547, %v551
      %v554 = vadd.f32 %v546, %v552
      %555 = vmax.xlane.f32.xlu0 %v554
      %v556 = vpop.xlane.xlu0 %555
      %v557 = vsub.f32 %v554, %v556
      %v558 = vmul.f32 %v557, 1.442695
      %v559 = vpow.pop %v558
      %560 = vadd.xlane.f32.xlu0 %v559
      %v561 = vpop.xlane.xlu0 %560
      %v562 = vrcp.pop %v561
      %v563 = vmul.f32 %v559, %v562
      %v564 = vpack.c.bf16 %v563, %v563
      %v565 = vld [vmem:[#allocation9] sm:$0xf]
      %v566 = vld [vmem:[#allocation9 + $0x4] sm:$0xf]
      %v567 = vld [vmem:[#allocation9 + $0x8] sm:$0xf]
      %v568 = vld [vmem:[#allocation9 + $0xc] sm:$0xf]
      %v569 = vld [vmem:[#allocation9 + $0x10] sm:$0xf]
      %v570 = vld [vmem:[#allocation9 + $0x14] sm:$0xf]
      %v571 = vld [vmem:[#allocation9 + $0x18] sm:$0xf]
      %v572 = vld [vmem:[#allocation9 + $0x1c] sm:$0xf]
      %v573 = vld [vmem:[#allocation9 + $0x20] sm:$0xf]
      %v574 = vld [vmem:[#allocation9 + $0x24] sm:$0xf]
      %v575 = vld [vmem:[#allocation9 + $0x28] sm:$0xf]
      %v576 = vld [vmem:[#allocation9 + $0x2c] sm:$0xf]
      %v577 = vld [vmem:[#allocation9 + $0x30] sm:$0xf]
      %v578 = vld [vmem:[#allocation9 + $0x34] sm:$0xf]
      %v579 = vld [vmem:[#allocation9 + $0x38] sm:$0xf]
      %v580 = vld [vmem:[#allocation9 + $0x3c] sm:$0xf]
      %v597 = vunpack.c.l.b16 %v565
      %v598 = vunpack.c.l.b16 %v566
      %v599 = vunpack.c.l.b16 %v567
      %v600 = vunpack.c.l.b16 %v568
      %v601 = vunpack.c.l.b16 %v569
      %v602 = vunpack.c.l.b16 %v570
      %v603 = vunpack.c.l.b16 %v571
      %v604 = vunpack.c.l.b16 %v572
      %v605 = vunpack.c.l.b16 %v573
      %v606 = vunpack.c.l.b16 %v574
      %v607 = vunpack.c.l.b16 %v575
      %v608 = vunpack.c.l.b16 %v576
      %v609 = vunpack.c.l.b16 %v577
      %v610 = vunpack.c.l.b16 %v578
      %v611 = vunpack.c.l.b16 %v579
      %v612 = vunpack.c.l.b16 %v580
      %v613 = vpack.c.b16 %v598, %v597
      %v614 = vpack.c.b16 %v600, %v599
      %v615 = vpack.c.b16 %v602, %v601
      %v616 = vpack.c.b16 %v604, %v603
      %v617 = vpack.c.b16 %v606, %v605
      %v618 = vpack.c.b16 %v608, %v607
      %v619 = vpack.c.b16 %v610, %v609
      %v620 = vpack.c.b16 %v612, %v611
      %629 = vmatprep.subr.bf16.mxu0 0
      %630 = vmatpush1.bf16.msra.mxu0 %v613
      %631 = vmatprep.subr.bf16.mxu0 0
      %632 = vmatpush1.bf16.msra.mxu0 %v614
      %633 = vmatprep.subr.bf16.mxu0 0
      %634 = vmatpush1.bf16.msra.mxu0 %v615
      %635 = vmatprep.subr.bf16.mxu0 0
      %636 = vmatpush1.bf16.msra.mxu0 %v616
      %637 = vmatprep.subr.bf16.mxu0 0
      %638 = vmatpush1.bf16.msra.mxu0 %v617
      %639 = vmatprep.subr.bf16.mxu0 0
      %640 = vmatpush1.bf16.msra.mxu0 %v618
      %641 = vmatprep.subr.bf16.mxu0 0
      %642 = vmatpush1.bf16.msra.mxu0 %v619
      %643 = vmatprep.subr.bf16.mxu0 0
      %644 = vmatpush1.bf16.msra.mxu0 %v620
      %645 = vmatprep.subr.bf16.mxu0 0
      %646 = vmatpush1.bf16.msra.mxu0 0
      %647 = vmatprep.subr.bf16.mxu0 0
      %648 = vmatpush1.bf16.msra.mxu0 0
      %649 = vmatprep.subr.bf16.mxu0 0
      %650 = vmatpush1.bf16.msra.mxu0 0
      %651 = vmatprep.subr.bf16.mxu0 0
      %652 = vmatpush1.bf16.msra.mxu0 0
      %653 = vmatprep.subr.bf16.mxu0 0
      %654 = vmatpush1.bf16.msra.mxu0 0
      %655 = vmatprep.subr.bf16.mxu0 0
      %656 = vmatpush1.bf16.msra.mxu0 0
      %657 = vmatprep.subr.bf16.mxu0 0
      %658 = vmatpush1.bf16.msra.mxu0 0
      %659 = vmatprep.subr.bf16.mxu0 0
      %660 = vmatpush1.bf16.msra.mxu0 0
      %661 = vmatprep.mubr.bf16.mxu0 0
      %662 = vmatmul.mubr.bf16.gmra.mrb[0].mxu0 %v564
      %v663 = vpop.f32.mrb[0].mxu0
      %v664 = vadd.f32 0.0, %v663
      %v665 = vpop.f32.mrb[0].mxu0
      %v666 = vpop.f32.mrb[0].mxu0
      %v667 = vpop.f32.mrb[0].mxu0
      %668 = vdwg.mxu0
      %v669 = vpack.c.bf16 %v664, %v664
      %v670 = vld [vmem:[#allocation14] sm:$0xf]
      %v671 = vld [vmem:[#allocation14 + $0x4] sm:$0xf]
      %v672 = vld [vmem:[#allocation14 + $0x8] sm:$0xf]
      %v673 = vld [vmem:[#allocation14 + $0xc] sm:$0xf]
      %v674 = vld [vmem:[#allocation14 + $0x10] sm:$0xf]
      %v675 = vld [vmem:[#allocation14 + $0x14] sm:$0xf]
      %v676 = vld [vmem:[#allocation14 + $0x18] sm:$0xf]
      %v677 = vld [vmem:[#allocation14 + $0x1c] sm:$0xf]
      %v678 = vld [vmem:[#allocation14 + $0x20] sm:$0xf]
      %v679 = vld [vmem:[#allocation14 + $0x24] sm:$0xf]
      %v680 = vld [vmem:[#allocation14 + $0x28] sm:$0xf]
      %v681 = vld [vmem:[#allocation14 + $0x2c] sm:$0xf]
      %v682 = vld [vmem:[#allocation14 + $0x30] sm:$0xf]
      %v683 = vld [vmem:[#allocation14 + $0x34] sm:$0xf]
      %v684 = vld [vmem:[#allocation14 + $0x38] sm:$0xf]
      %v685 = vld [vmem:[#allocation14 + $0x3c] sm:$0xf]
      %v702 = vunpack.c.l.b16 %v670
      %v703 = vunpack.c.l.b16 %v671
      %v704 = vunpack.c.l.b16 %v672
      %v705 = vunpack.c.l.b16 %v673
      %v706 = vunpack.c.l.b16 %v674
      %v707 = vunpack.c.l.b16 %v675
      %v708 = vunpack.c.l.b16 %v676
      %v709 = vunpack.c.l.b16 %v677
      %v710 = vunpack.c.l.b16 %v678
      %v711 = vunpack.c.l.b16 %v679
      %v712 = vunpack.c.l.b16 %v680
      %v713 = vunpack.c.l.b16 %v681
      %v714 = vunpack.c.l.b16 %v682
      %v715 = vunpack.c.l.b16 %v683
      %v716 = vunpack.c.l.b16 %v684
      %v717 = vunpack.c.l.b16 %v685
      %v718 = vpack.c.b16 %v703, %v702
      %v719 = vpack.c.b16 %v705, %v704
      %v720 = vpack.c.b16 %v707, %v706
      %v721 = vpack.c.b16 %v709, %v708
      %v722 = vpack.c.b16 %v711, %v710
      %v723 = vpack.c.b16 %v713, %v712
      %v724 = vpack.c.b16 %v715, %v714
      %v725 = vpack.c.b16 %v717, %v716
      %734 = vmatprep.subr.bf16.mxu0 0
      %735 = vmatpush1.bf16.msra.mxu0 %v718
      %736 = vmatprep.subr.bf16.mxu0 0
      %737 = vmatpush1.bf16.msra.mxu0 %v719
      %738 = vmatprep.subr.bf16.mxu0 0
      %739 = vmatpush1.bf16.msra.mxu0 %v720
      %740 = vmatprep.subr.bf16.mxu0 0
      %741 = vmatpush1.bf16.msra.mxu0 %v721
      %742 = vmatprep.subr.bf16.mxu0 0
      %743 = vmatpush1.bf16.msra.mxu0 %v722
      %744 = vmatprep.subr.bf16.mxu0 0
      %745 = vmatpush1.bf16.msra.mxu0 %v723
      %746 = vmatprep.subr.bf16.mxu0 0
      %747 = vmatpush1.bf16.msra.mxu0 %v724
      %748 = vmatprep.subr.bf16.mxu0 0
      %749 = vmatpush1.bf16.msra.mxu0 %v725
      %750 = vmatprep.subr.bf16.mxu0 0
      %751 = vmatpush1.bf16.msra.mxu0 0
      %752 = vmatprep.subr.bf16.mxu0 0
      %753 = vmatpush1.bf16.msra.mxu0 0
      %754 = vmatprep.subr.bf16.mxu0 0
      %755 = vmatpush1.bf16.msra.mxu0 0
      %756 = vmatprep.subr.bf16.mxu0 0
      %757 = vmatpush1.bf16.msra.mxu0 0
      %758 = vmatprep.subr.bf16.mxu0 0
      %759 = vmatpush1.bf16.msra.mxu0 0
      %760 = vmatprep.subr.bf16.mxu0 0
      %761 = vmatpush1.bf16.msra.mxu0 0
      %762 = vmatprep.subr.bf16.mxu0 0
      %763 = vmatpush1.bf16.msra.mxu0 0
      %764 = vmatprep.subr.bf16.mxu0 0
      %765 = vmatpush1.bf16.msra.mxu0 0
      %766 = vmatprep.mubr.bf16.mxu0 0
      %767 = vmatmul.mubr.bf16.gmra.mrb[0].mxu0 %v669
      %v768 = vpop.f32.mrb[0].mxu0
      %v769 = vadd.f32 0.0, %v768
      %v770 = vpop.f32.mrb[0].mxu0
      %v771 = vpop.f32.mrb[0].mxu0
      %v772 = vpop.f32.mrb[0].mxu0
      %773 = vdwg.mxu0
      %v774 = vadd.f32 %v268, %v769
      %v775 = vld [vmem:[%s6 + $0x1] sm:$0x1]
      %v777 = vlaneseq
      %v778 = vshrl.u32 %v777, 7
      %v779 = vsub.s32 0, %v778
      %v780 = vrot.slane %v775, %v779
      %v782 = vadd.f32 %v774, %v780
      %v783 = vmax.f32 %v782, 0.0
      %v784 = vpack.c.bf16 %v783, %v783
      %v785 = vld [vmem:[#allocation15] sm:$0xff]
      %v786 = vld [vmem:[#allocation15 + $0x8] sm:$0xf]
      %v787 = vld [vmem:[#allocation15 + $0xc] sm:$0xff]
      %v788 = vld [vmem:[#allocation15 + $0x14] sm:$0xf]
      %v789 = vld [vmem:[#allocation15 + $0x18] sm:$0xff]
      %v790 = vld [vmem:[#allocation15 + $0x20] sm:$0xf]
      %v791 = vld [vmem:[#allocation15 + $0x24] sm:$0xff]
      %v792 = vld [vmem:[#allocation15 + $0x2c] sm:$0xf]
      %v793 = vld [vmem:[#allocation15 + $0x30] sm:$0xff]
      %v794 = vld [vmem:[#allocation15 + $0x38] sm:$0xf]
      %v795 = vld [vmem:[#allocation15 + $0x3c] sm:$0xff]
      %v796 = vld [vmem:[#allocation15 + $0x44] sm:$0xf]
      %v797 = vld [vmem:[#allocation15 + $0x48] sm:$0xff]
      %v798 = vld [vmem:[#allocation15 + $0x50] sm:$0xf]
      %v799 = vld [vmem:[#allocation15 + $0x54] sm:$0xff]
      %v800 = vld [vmem:[#allocation15 + $0x5c] sm:$0xf]
      %v801 = vld [vmem:[#allocation15 + $0x60] sm:$0xff]
      %v802 = vld [vmem:[#allocation15 + $0x68] sm:$0xf]
      %v803 = vld [vmem:[#allocation15 + $0x6c] sm:$0xff]
      %v804 = vld [vmem:[#allocation15 + $0x74] sm:$0xf]
      %v805 = vld [vmem:[#allocation15 + $0x78] sm:$0xff]
      %v806 = vld [vmem:[#allocation15 + $0x80] sm:$0xf]
      %v807 = vld [vmem:[#allocation15 + $0x84] sm:$0xff]
      %v808 = vld [vmem:[#allocation15 + $0x8c] sm:$0xf]
      %v809 = vld [vmem:[#allocation15 + $0x90] sm:$0xff]
      %v810 = vld [vmem:[#allocation15 + $0x98] sm:$0xf]
      %v811 = vld [vmem:[#allocation15 + $0x9c] sm:$0xff]
      %v812 = vld [vmem:[#allocation15 + $0xa4] sm:$0xf]
      %v813 = vld [vmem:[#allocation15 + $0xa8] sm:$0xff]
      %v814 = vld [vmem:[#allocation15 + $0xb0] sm:$0xf]
      %v815 = vld [vmem:[#allocation15 + $0xb4] sm:$0xff]
      %v816 = vld [vmem:[#allocation15 + $0xbc] sm:$0xf]
      %v817 = vld [vmem:[%s6 + $0x2] sm:$0x7]
      %v819 = vlaneseq
      %v820 = vshrl.u32 %v819, 7
      %v821 = vsub.s32 0, %v820
      %v822 = vrot.slane %v817, %v821
      %v823 = vlaneseq
      %v824 = vshrl.u32 %v823, 7
      %v825 = vsub.s32 1, %v824
      %v826 = vrot.slane %v817, %v825
      %v827 = vlaneseq
      %v828 = vshrl.u32 %v827, 7
      %v829 = vsub.s32 2, %v828
      %v830 = vrot.slane %v817, %v829
      %v866 = vunpack.c.l.b16 %v785
      %v867 = vunpack.c.h.b16 %v785
      %v868 = vunpack.c.l.b16 %v786
      %v869 = vunpack.c.l.b16 %v787
      %v870 = vunpack.c.h.b16 %v787
      %v871 = vunpack.c.l.b16 %v788
      %v872 = vunpack.c.l.b16 %v789
      %v873 = vunpack.c.h.b16 %v789
      %v874 = vunpack.c.l.b16 %v790
      %v875 = vunpack.c.l.b16 %v791
      %v876 = vunpack.c.h.b16 %v791
      %v877 = vunpack.c.l.b16 %v792
      %v878 = vunpack.c.l.b16 %v793
      %v879 = vunpack.c.h.b16 %v793
      %v880 = vunpack.c.l.b16 %v794
      %v881 = vunpack.c.l.b16 %v795
      %v882 = vunpack.c.h.b16 %v795
      %v883 = vunpack.c.l.b16 %v796
      %v884 = vunpack.c.l.b16 %v797
      %v885 = vunpack.c.h.b16 %v797
      %v886 = vunpack.c.l.b16 %v798
      %v887 = vunpack.c.l.b16 %v799
      %v888 = vunpack.c.h.b16 %v799
      %v889 = vunpack.c.l.b16 %v800
      %v890 = vunpack.c.l.b16 %v801
      %v891 = vunpack.c.h.b16 %v801
      %v892 = vunpack.c.l.b16 %v802
      %v893 = vunpack.c.l.b16 %v803
      %v894 = vunpack.c.h.b16 %v803
      %v895 = vunpack.c.l.b16 %v804
      %v896 = vunpack.c.l.b16 %v805
      %v897 = vunpack.c.h.b16 %v805
      %v898 = vunpack.c.l.b16 %v806
      %v899 = vunpack.c.l.b16 %v807
      %v900 = vunpack.c.h.b16 %v807
      %v901 = vunpack.c.l.b16 %v808
      %v902 = vunpack.c.l.b16 %v809
      %v903 = vunpack.c.h.b16 %v809
      %v904 = vunpack.c.l.b16 %v810
      %v905 = vunpack.c.l.b16 %v811
      %v906 = vunpack.c.h.b16 %v811
      %v907 = vunpack.c.l.b16 %v812
      %v908 = vunpack.c.l.b16 %v813
      %v909 = vunpack.c.h.b16 %v813
      %v910 = vunpack.c.l.b16 %v814
      %v911 = vunpack.c.l.b16 %v815
      %v912 = vunpack.c.h.b16 %v815
      %v913 = vunpack.c.l.b16 %v816
      %v914 = vpack.c.b16 %v869, %v866
      %v915 = vpack.c.b16 %v870, %v867
      %v916 = vpack.c.b16 %v871, %v868
      %v917 = vpack.c.b16 %v875, %v872
      %v918 = vpack.c.b16 %v876, %v873
      %v919 = vpack.c.b16 %v877, %v874
      %v920 = vpack.c.b16 %v881, %v878
      %v921 = vpack.c.b16 %v882, %v879
      %v922 = vpack.c.b16 %v883, %v880
      %v923 = vpack.c.b16 %v887, %v884
      %v924 = vpack.c.b16 %v888, %v885
      %v925 = vpack.c.b16 %v889, %v886
      %v926 = vpack.c.b16 %v893, %v890
      %v927 = vpack.c.b16 %v894, %v891
      %v928 = vpack.c.b16 %v895, %v892
      %v929 = vpack.c.b16 %v899, %v896
      %v930 = vpack.c.b16 %v900, %v897
      %v931 = vpack.c.b16 %v901, %v898
      %v932 = vpack.c.b16 %v905, %v902
      %v933 = vpack.c.b16 %v906, %v903
      %v934 = vpack.c.b16 %v907, %v904
      %v935 = vpack.c.b16 %v911, %v908
      %v936 = vpack.c.b16 %v912, %v909
      %v937 = vpack.c.b16 %v913, %v910
      %962 = vmatprep.subr.bf16.mxu0 %v915
      %963 = vmatpush1.bf16.msra.mxu0 %v914
      %964 = vmatprep.subr.bf16.mxu0 %v918
      %965 = vmatpush1.bf16.msra.mxu0 %v917
      %966 = vmatprep.subr.bf16.mxu0 %v921
      %967 = vmatpush1.bf16.msra.mxu0 %v920
      %968 = vmatprep.subr.bf16.mxu0 %v924
      %969 = vmatpush1.bf16.msra.mxu0 %v923
      %970 = vmatprep.subr.bf16.mxu0 %v927
      %971 = vmatpush1.bf16.msra.mxu0 %v926
      %972 = vmatprep.subr.bf16.mxu0 %v930
      %973 = vmatpush1.bf16.msra.mxu0 %v929
      %974 = vmatprep.subr.bf16.mxu0 %v933
      %975 = vmatpush1.bf16.msra.mxu0 %v932
      %976 = vmatprep.subr.bf16.mxu0 %v936
      %977 = vmatpush1.bf16.msra.mxu0 %v935
      %978 = vmatprep.subr.bf16.mxu0 0
      %979 = vmatpush1.bf16.msra.mxu0 0
      %980 = vmatprep.subr.bf16.mxu0 0
      %981 = vmatpush1.bf16.msra.mxu0 0
      %982 = vmatprep.subr.bf16.mxu0 0
      %983 = vmatpush1.bf16.msra.mxu0 0
      %984 = vmatprep.subr.bf16.mxu0 0
      %985 = vmatpush1.bf16.msra.mxu0 0
      %986 = vmatprep.subr.bf16.mxu0 0
      %987 = vmatpush1.bf16.msra.mxu0 0
      %988 = vmatprep.subr.bf16.mxu0 0
      %989 = vmatpush1.bf16.msra.mxu0 0
      %990 = vmatprep.subr.bf16.mxu0 0
      %991 = vmatpush1.bf16.msra.mxu0 0
      %992 = vmatprep.subr.bf16.mxu0 0
      %993 = vmatpush1.bf16.msra.mxu0 0
      %994 = vmatprep.mubr.bf16.mxu0 0
      %995 = vmatmul.mubr.bf16.gmra.mrb[0].mxu0 %v784
      %v996 = vpop.f32.mrb[0].mxu0
      %v997 = vadd.f32 %v822, %v996
      %v998 = vpop.f32.mrb[0].mxu0
      %v999 = vadd.f32 %v826, %v998
      %v1000 = vpop.f32.mrb[0].mxu0
      %v1001 = vpop.f32.mrb[0].mxu0
      %1002 = vdwg.mxu0
      %1003 = vmatprep.subr.bf16.mxu0 0
      %1004 = vmatpush1.bf16.msra.mxu0 %v916
      %1005 = vmatprep.subr.bf16.mxu0 0
      %1006 = vmatpush1.bf16.msra.mxu0 %v919
      %1007 = vmatprep.subr.bf16.mxu0 0
      %1008 = vmatpush1.bf16.msra.mxu0 %v922
      %1009 = vmatprep.subr.bf16.mxu0 0
      %1010 = vmatpush1.bf16.msra.mxu0 %v925
      %1011 = vmatprep.subr.bf16.mxu0 0
      %1012 = vmatpush1.bf16.msra.mxu0 %v928
      %1013 = vmatprep.subr.bf16.mxu0 0
      %1014 = vmatpush1.bf16.msra.mxu0 %v931
      %1015 = vmatprep.subr.bf16.mxu0 0
      %1016 = vmatpush1.bf16.msra.mxu0 %v934
      %1017 = vmatprep.subr.bf16.mxu0 0
      %1018 = vmatpush1.bf16.msra.mxu0 %v937
      %1019 = vmatprep.subr.bf16.mxu0 0
      %1020 = vmatpush1.bf16.msra.mxu0 0
      %1021 = vmatprep.subr.bf16.mxu0 0
      %1022 = vmatpush1.bf16.msra.mxu0 0
      %1023 = vmatprep.subr.bf16.mxu0 0
      %1024 = vmatpush1.bf16.msra.mxu0 0
      %1025 = vmatprep.subr.bf16.mxu0 0
      %1026 = vmatpush1.bf16.msra.mxu0 0
      %1027 = vmatprep.subr.bf16.mxu0 0
      %1028 = vmatpush1.bf16.msra.mxu0 0
      %1029 = vmatprep.subr.bf16.mxu0 0
      %1030 = vmatpush1.bf16.msra.mxu0 0
      %1031 = vmatprep.subr.bf16.mxu0 0
      %1032 = vmatpush1.bf16.msra.mxu0 0
      %1033 = vmatprep.subr.bf16.mxu0 0
      %1034 = vmatpush1.bf16.msra.mxu0 0
      %1035 = vmatprep.mubr.bf16.mxu0 0
      %1036 = vmatmul.mubr.bf16.gmra.mrb[0].mxu0 %v784
      %v1037 = vpop.f32.mrb[0].mxu0
      %v1038 = vadd.f32 %v830, %v1037
      %v1039 = vpop.f32.mrb[0].mxu0
      %v1040 = vpop.f32.mrb[0].mxu0
      %v1041 = vpop.f32.mrb[0].mxu0
      %1042 = vdwg.mxu0
      %v1043 = vld [vmem:[%s6 + $0x5] sm:$0x7]
      %v1045 = vlaneseq
      %v1046 = vshrl.u32 %v1045, 7
      %v1047 = vsub.s32 0, %v1046
      %v1048 = vrot.slane %v1043, %v1047
      %v1049 = vlaneseq
      %v1050 = vshrl.u32 %v1049, 7
      %v1051 = vsub.s32 1, %v1050
      %v1052 = vrot.slane %v1043, %v1051
      %v1053 = vlaneseq
      %v1054 = vshrl.u32 %v1053, 7
      %v1055 = vsub.s32 2, %v1054
      %v1056 = vrot.slane %v1043, %v1055
      %v1060 = vadd.f32 %v501, %v1048
      %v1061 = vadd.f32 %v540, %v1052
      %v1062 = vadd.f32 %v542, %v1056
      %v1063 = vadd.f32 %v997, %v1060
      %v1064 = vxor.u32 %v1063, 2147483648
      %v1065 = vmul.f32 %v1064, 1.442695
      %v1066 = vpow.pop %v1065
      %v1067 = vadd.f32 %v1066, 1.0
      %v1068 = vrcp.pop %v1067
      %v1069 = vmul.f32 1.0, %v1068
      %v1070 = vadd.f32 %v999, %v1061
      %v1071 = vxor.u32 %v1070, 2147483648
      %v1072 = vmul.f32 %v1071, 1.442695
      %v1073 = vpow.pop %v1072
      %v1074 = vadd.f32 %v1073, 1.0
      %v1075 = vrcp.pop %v1074
      %v1076 = vmul.f32 1.0, %v1075
      %v1077 = vmul.f32 %v1069, %v1062
      %v1078 = vadd.f32 %v1038, %v1077
      %v1079 = vtanh.pop %v1078
      %v1080 = vsub.f32 1.0, %v1076
      %v1081 = vmul.f32 %v1080, %v1079
      %v1082 = vmul.f32 %v1076, %v132
      %v1083 = vadd.f32 %v1081, %v1082
      %1084 = vst [vmem:[#allocation2] sm:$0xff] %v1083
      %vm1085 = vcmask 7168
      %1086 = vst.msk [vmem:[#allocation4] sm:$0xff] %vm1085, -inf
      %1087 = vst.msk [vmem:[#allocation5] sm:$0xff] %vm1085, 0.0
      %1088 = vst [vmem:[#allocation18 + $0x8] sm:$0xff] %v1083
      %1089 = vst [vmem:[#allocation18 + $0x10] sm:$0xff] %v563
    $region69: #{tpu_custom_call.1} parent=1 // pred_fallthru
      _
    %v1090 = vld [vmem:[#allocation2] sm:$0xff]
    %v1091 = vpack.c.bf16 %v1090, %v1090
    %v1092 = vld [vmem:[#allocation17] sm:$0xf]
    %v1093 = vld [vmem:[#allocation17 + $0x4] sm:$0xf]
    %v1094 = vld [vmem:[#allocation17 + $0x8] sm:$0xf]
    %v1095 = vld [vmem:[#allocation17 + $0xc] sm:$0xf]
    %v1096 = vld [vmem:[#allocation17 + $0x10] sm:$0xf]
    %v1097 = vld [vmem:[#allocation17 + $0x14] sm:$0xf]
    %v1098 = vld [vmem:[#allocation17 + $0x18] sm:$0xf]
    %v1099 = vld [vmem:[#allocation17 + $0x1c] sm:$0xf]
    %v1100 = vld [vmem:[#allocation17 + $0x20] sm:$0xf]
    %v1101 = vld [vmem:[#allocation17 + $0x24] sm:$0xf]
    %v1102 = vld [vmem:[#allocation17 + $0x28] sm:$0xf]
    %v1103 = vld [vmem:[#allocation17 + $0x2c] sm:$0xf]
    %v1104 = vld [vmem:[#allocation17 + $0x30] sm:$0xf]
    %v1105 = vld [vmem:[#allocation17 + $0x34] sm:$0xf]
    %v1106 = vld [vmem:[#allocation17 + $0x38] sm:$0xf]
    %v1107 = vld [vmem:[#allocation17 + $0x3c] sm:$0xf]
    %v1108 = vld [vmem:[%s8] sm:$0x1]
    %v1110 = vlaneseq
    %v1111 = vshrl.u32 %v1110, 7
    %v1112 = vsub.s32 0, %v1111
    %v1113 = vrot.slane %v1108, %v1112
    %v1131 = vunpack.c.l.b16 %v1092
    %v1132 = vunpack.c.l.b16 %v1093
    %v1133 = vunpack.c.l.b16 %v1094
    %v1134 = vunpack.c.l.b16 %v1095
    %v1135 = vunpack.c.l.b16 %v1096
    %v1136 = vunpack.c.l.b16 %v1097
    %v1137 = vunpack.c.l.b16 %v1098
    %v1138 = vunpack.c.l.b16 %v1099
    %v1139 = vunpack.c.l.b16 %v1100
    %v1140 = vunpack.c.l.b16 %v1101
    %v1141 = vunpack.c.l.b16 %v1102
    %v1142 = vunpack.c.l.b16 %v1103
    %v1143 = vunpack.c.l.b16 %v1104
    %v1144 = vunpack.c.l.b16 %v1105
    %v1145 = vunpack.c.l.b16 %v1106
    %v1146 = vunpack.c.l.b16 %v1107
    %v1147 = vpack.c.b16 %v1132, %v1131
    %v1148 = vpack.c.b16 %v1134, %v1133
    %v1149 = vpack.c.b16 %v1136, %v1135
    %v1150 = vpack.c.b16 %v1138, %v1137
    %v1151 = vpack.c.b16 %v1140, %v1139
    %v1152 = vpack.c.b16 %v1142, %v1141
    %v1153 = vpack.c.b16 %v1144, %v1143
    %v1154 = vpack.c.b16 %v1146, %v1145
    %1163 = vmatprep.subr.bf16.mxu0 0
    %1164 = vmatpush1.bf16.msra.mxu0 %v1147
    %1165 = vmatprep.subr.bf16.mxu0 0
    %1166 = vmatpush1.bf16.msra.mxu0 %v1148
    %1167 = vmatprep.subr.bf16.mxu0 0
    %1168 = vmatpush1.bf16.msra.mxu0 %v1149
    %1169 = vmatprep.subr.bf16.mxu0 0
    %1170 = vmatpush1.bf16.msra.mxu0 %v1150
    %1171 = vmatprep.subr.bf16.mxu0 0
    %1172 = vmatpush1.bf16.msra.mxu0 %v1151
    %1173 = vmatprep.subr.bf16.mxu0 0
    %1174 = vmatpush1.bf16.msra.mxu0 %v1152
    %1175 = vmatprep.subr.bf16.mxu0 0
    %1176 = vmatpush1.bf16.msra.mxu0 %v1153
    %1177 = vmatprep.subr.bf16.mxu0 0
    %1178 = vmatpush1.bf16.msra.mxu0 %v1154
    %1179 = vmatprep.subr.bf16.mxu0 0
    %1180 = vmatpush1.bf16.msra.mxu0 0
    %1181 = vmatprep.subr.bf16.mxu0 0
    %1182 = vmatpush1.bf16.msra.mxu0 0
    %1183 = vmatprep.subr.bf16.mxu0 0
    %1184 = vmatpush1.bf16.msra.mxu0 0
    %1185 = vmatprep.subr.bf16.mxu0 0
    %1186 = vmatpush1.bf16.msra.mxu0 0
    %1187 = vmatprep.subr.bf16.mxu0 0
    %1188 = vmatpush1.bf16.msra.mxu0 0
    %1189 = vmatprep.subr.bf16.mxu0 0
    %1190 = vmatpush1.bf16.msra.mxu0 0
    %1191 = vmatprep.subr.bf16.mxu0 0
    %1192 = vmatpush1.bf16.msra.mxu0 0
    %1193 = vmatprep.subr.bf16.mxu0 0
    %1194 = vmatpush1.bf16.msra.mxu0 0
    %1195 = vmatprep.mubr.bf16.mxu0 0
    %1196 = vmatmul.mubr.bf16.gmra.mrb[0].mxu0 %v1091
    %v1197 = vpop.f32.mrb[0].mxu0
    %v1198 = vadd.f32 %v1113, %v1197
    %v1199 = vpop.f32.mrb[0].mxu0
    %v1200 = vpop.f32.mrb[0].mxu0
    %v1201 = vpop.f32.mrb[0].mxu0
    %1202 = vdwg.mxu0
    %s1203 = smul.u32 0, 8
    %s1204 = scalar_lea.vmem [#allocation3], %s1203
    %1205 = vst [vmem:[%s1204] sm:$0xff] %v1198
    %v1206 = vld [vmem:[#allocation4] sm:$0xff]
    %1207 = vmax.xlane.f32.xlu0 %v1198
    %v1208 = vpop.xlane.xlu0 %1207
    %v1209 = vmax.f32 %v1206, %v1208
    %v1210 = vld [vmem:[#allocation5] sm:$0xff]
    %v1211 = vsub.f32 %v1206, %v1209
    %v1212 = vmul.f32 %v1211, 1.442695
    %v1213 = vpow.pop %v1212
    %v1214 = vmul.f32 %v1210, %v1213
    %1216 = vset.pattern.permute.xlu0 0
    %1217 = vperm.xlu0 %1216, %v1209
    %v1218 = vpop.permute.xlu0 %1217
    %v1220 = vsub.f32 %v1198, %v1218
    %v1221 = vmul.f32 %v1220, 1.442695
    %v1222 = vpow.pop %v1221
    %1223 = vadd.xlane.f32.xlu0 %v1222
    %v1224 = vpop.xlane.xlu0 %1223
    %v1225 = vadd.f32 %v1214, %v1224
    %vm1226 = vcmask 7168
    %1227 = vst.msk [vmem:[#allocation5] sm:$0xff] %vm1226, %v1225
    %1228 = vst.msk [vmem:[#allocation4] sm:$0xff] %vm1226, %v1209
    // Predicated region
    $region70: #{tpu_custom_call.1} parent=1 // pred_check
      %p1229 = pneg %p127
    $region71: #{tpu_custom_call.1} parent=1 // pred_check_branch
      %1231 = sbr.rel (%p1229) target = $region73
    $region72: #{tpu_custom_call.1} parent=1 // pred_region
      %v1232 = vld [vmem:[#allocation4] sm:$0xff]
      %v1233 = vld [vmem:[#allocation5] sm:$0xff]
      %v1234 = vlog2.pop %v1233
      %v1235 = vmul.f32 %v1234, 0.6931472
      %v1236 = vadd.f32 %v1232, %v1235
      %v1237 = vld [vmem:[#allocation3] sm:$0xff]
      %1239 = vset.pattern.permute.xlu0 0
      %1240 = vperm.xlu0 %1239, %v1236
      %v1241 = vpop.permute.xlu0 %1240
      %v1243 = vsub.f32 %v1237, %v1241
      %1244 = vst [vmem:[#allocation18] sm:$0xff] %v1243
    $region73: #{tpu_custom_call.1} parent=1 // pred_fallthru
      _
    // Predicated region
    $region74: #{tpu_custom_call.1} parent=1 // pred_check
      _
    $region75: #{tpu_custom_call.1} parent=1 // pred_check_branch
      %1246 = sbr.rel (0) target = $region77
    $region76: #{tpu_custom_call.1} parent=1 // pred_region
      %s1248 = ssub.s32 384, 384
      %1249 = vsyncadd [#allocation8], %s1248
      %s1251 = sshll.u32 [#allocation18], 4
      %s1252 = int_to_ptr.vmem [resolvable:$true] %s1251
      %1254 = dma.vmem_to_hbm [thread:$0]  %s1252, 384, %s9, [#allocation8]
    $region77: #{tpu_custom_call.1} parent=1 // pred_fallthru
      _
    // Predicated region
    $region78: #{tpu_custom_call.1} parent=1 // pred_check
      _
    $region79: #{tpu_custom_call.1} parent=1 // pred_check_branch
      %1256 = sbr.rel (0) target = $region81
    $region80: #{tpu_custom_call.1} parent=1 // pred_region
      %1257 = dma.done [#allocation8], 384
    $region81: #{tpu_custom_call.1} parent=1 // pred_fallthru
      _
    %1258 = vsyncpa [#allocation7], 1
    %1259 = vsyncpa [#allocation10], 1
    %1260 = vsyncpa [#allocation13], 1
    %1261 = vsyncpa [#allocation16], 1
    %1262 = vsyncpa [#allocation8], 1

</llo_original>
